<compile_context>
chip_gen: v5e
topology: v5e:2x2
jax: 0.10.0
libtpu: 0.0.40
codegen_flags: <defaults>
</compile_context>

<pallas_src>
from functools import partial

import jax
import jax.numpy as jnp
from jax.experimental import pallas as pl
from jax.experimental.pallas import tpu as pltpu


def _double_conv_kernel(x_ref, w1_ref, s1_ref, w2_ref, s2_ref, o_ref, y1pad_ref, *, H, W):
    """Fused (1x1 conv+BN+ReLU) -> (3x3 conv SAME + BN + ReLU) for one image.

    x_ref:     (1, Cin, H*W)      input image, channels in sublanes, spatial in lanes
    w1_ref:    (Cmid, Cin)        1x1 weights (transposed) with BN1 scale folded in
    s1_ref:    (Cmid, 1)          BN1 shift (includes conv bias), f32
    w2_ref:    (9, Cout, Cmid)    3x3 weights (tap = kh*3+kw, transposed) with BN2 scale
    s2_ref:    (Cout, 1)          BN2 shift (includes conv bias), f32
    o_ref:     (1, Cout, H*W)     output image
    y1pad_ref: (Cmid, H+2, W+2)   VMEM scratch: zero-padded stage-1 activation
    """
    Cmid = w1_ref.shape[0]
    Cout = o_ref.shape[1]

    # ---- stage 1: 1x1 conv + BN + ReLU (single dot, f32 accumulation) ----
    x = x_ref[0]                                               # (Cin, H*W), lane-dense
    y1 = jnp.dot(w1_ref[...], x, preferred_element_type=jnp.float32) + s1_ref[...]
    y1 = jnp.maximum(y1, 0.0)                                  # (Cmid, H*W), f32

    # ---- zero-padded stage-1 tile, entirely in VMEM (SAME padding for the 3x3 conv) ----
    # Zeroing the whole (tiny) scratch every step keeps it correct under megacore grid
    # sharding (each TensorCore has its own scratch); only the 1-wide border needs it.
    y1pad_ref[...] = jnp.zeros_like(y1pad_ref)
    y1pad_ref[:, 1:H + 1, 1:W + 1] = y1.reshape(Cmid, H, W).astype(y1pad_ref.dtype)

    # ---- stage 2: 3x3 SAME conv + BN + ReLU as 9 shifted channel contractions ----
    acc = jnp.zeros((Cout, H * W), jnp.float32)
    for t in range(9):                                         # taps read straight from ref
        kh, kw = t // 3, t % 3
        patch = y1pad_ref[:, kh:kh + H, kw:kw + W].reshape(Cmid, H * W)
        acc = acc + jnp.dot(w2_ref[t], patch, preferred_element_type=jnp.float32)
    y2 = jnp.maximum(acc + s2_ref[...], 0.0)                   # f32 epilogue (v5e-friendly)
    o_ref[0] = y2.astype(o_ref.dtype)                          # lane-dense (Cout, H*W) store


def double_conv_pallas(x_nchw, params, eps=1e-5, storage_dtype=jnp.float32):
    """Forward pass of _DoubleConv (inference-mode BatchNorm) as one fused Pallas kernel.

    Input/output stay in PyTorch's NCHW layout (no transposes); set
    storage_dtype=jnp.bfloat16 on v6e/v7x to halve input/weight HBM traffic
    (accumulation and epilogue remain float32).
    """
    N, Cin, H, W = x_nchw.shape
    Cmid = params["w1"].shape[1]
    Cout = params["w2"].shape[2]
    HW = H * W

    # Fold eval-mode BatchNorm (and conv bias) into weights / per-channel shifts.
    scale1 = params["gamma1"] / jnp.sqrt(params["var1"] + eps)
    w1t = (params["w1"] * scale1[None, :]).T.astype(storage_dtype)              # (Cmid, Cin)
    shift1 = ((params["b1"] - params["mean1"]) * scale1
              + params["beta1"]).reshape(Cmid, 1).astype(jnp.float32)
    scale2 = params["gamma2"] / jnp.sqrt(params["var2"] + eps)
    w2t = jnp.transpose(params["w2"] * scale2[None, None, :],
                        (0, 2, 1)).astype(storage_dtype)                        # (9, Cout, Cmid)
    shift2 = ((params["b2"] - params["mean2"]) * scale2
              + params["beta2"]).reshape(Cout, 1).astype(jnp.float32)

    # Keep NCHW end-to-end; only merge the contiguous (H, W) dims so the spatial extent
    # sits in the 128-wide lane dimension (free reshape, no transpose / extra HBM pass).
    x = x_nchw.reshape(N, Cin, HW).astype(storage_dtype)

    kernel = partial(_double_conv_kernel, H=H, W=W)
    y = pl.pallas_call(
        kernel,
        out_shape=jax.ShapeDtypeStruct((N, Cout, HW), jnp.float32),
        grid=(N,),                                             # >= 2 steps keeps both v7x TCs busy
        in_specs=[
            pl.BlockSpec((1, Cin, HW), lambda n: (n, 0, 0)),   # lane-dense input block
            pl.BlockSpec((Cmid, Cin), lambda n: (0, 0)),
            pl.BlockSpec((Cmid, 1), lambda n: (0, 0)),
            pl.BlockSpec((9, Cout, Cmid), lambda n: (0, 0, 0)),
            pl.BlockSpec((Cout, 1), lambda n: (0, 0)),
        ],
        out_specs=pl.BlockSpec((1, Cout, HW), lambda n: (n, 0, 0)),  # lane-dense output block
        scratch_shapes=[pltpu.VMEM((Cmid, H + 2, W + 2), storage_dtype)],
        compiler_params=pltpu.CompilerParams(
            dimension_semantics=("parallel",),
            vmem_limit_bytes=32 * 1024 * 1024,                 # explicit; < v7x 64 MiB physical
        ),
    )(x, w1t, shift1, w2t, shift2)

    return y.reshape(N, Cout, H, W)


def double_conv_reference(x_nchw, params, eps=1e-5):
    """Pure-JAX NCHW reference (same math, via lax.conv) for correctness checking."""
    x = x_nchw.astype(jnp.float32)
    Cin = params["w1"].shape[0]
    Cmid = params["w1"].shape[1]
    Cout = params["w2"].shape[2]

    w1 = params["w1"].T.reshape(Cmid, Cin, 1, 1)
    y = jax.lax.conv_general_dilated(
        x, w1, (1, 1), "VALID",
        dimension_numbers=("NCHW", "OIHW", "NCHW")) + params["b1"].reshape(1, Cmid, 1, 1)
    y = ((y - params["mean1"].reshape(1, -1, 1, 1))
         / jnp.sqrt(params["var1"].reshape(1, -1, 1, 1) + eps)
         * params["gamma1"].reshape(1, -1, 1, 1) + params["beta1"].reshape(1, -1, 1, 1))
    y = jnp.maximum(y, 0.0)

    w2 = jnp.transpose(params["w2"].reshape(3, 3, Cmid, Cout), (3, 2, 0, 1))   # OIHW
    y = jax.lax.conv_general_dilated(
        y, w2, (1, 1), "SAME",
        dimension_numbers=("NCHW", "OIHW", "NCHW")) + params["b2"].reshape(1, Cout, 1, 1)
    y = ((y - params["mean2"].reshape(1, -1, 1, 1))
         / jnp.sqrt(params["var2"].reshape(1, -1, 1, 1) + eps)
         * params["gamma2"].reshape(1, -1, 1, 1) + params["beta2"].reshape(1, -1, 1, 1))
    return jnp.maximum(y, 0.0)


def init_params(key, in_ch, mid_ch, out_ch):
    """Deterministic synthetic parameters matching _DoubleConv(in_ch, mid_ch, out_ch)."""
    c_in_total = in_ch + mid_ch
    ks = jax.random.split(key, 10)
    params = {
        # Conv2d(in_ch+mid_ch, mid_ch, k=1): torch weight (mid, in+mid, 1, 1) -> (in+mid, mid)
        "w1": 0.1 * jax.random.normal(ks[0], (c_in_total, mid_ch), jnp.float32),
        "b1": 0.1 * jax.random.normal(ks[1], (mid_ch,), jnp.float32),
        "gamma1": 1.0 + 0.1 * jax.random.normal(ks[2], (mid_ch,), jnp.float32),
        "beta1": 0.1 * jax.random.normal(ks[3], (mid_ch,), jnp.float32),
        "mean1": 0.1 * jax.random.normal(ks[4], (mid_ch,), jnp.float32),
        "var1": jax.random.uniform(ks[5], (mid_ch,), jnp.float32, 0.5, 1.5),
        # Conv2d(mid_ch, out_ch, k=3, pad=1): torch weight (out, mid, 3, 3) -> (9, mid, out)
        "w2": 0.1 * jax.random.normal(ks[6], (9, mid_ch, out_ch), jnp.float32),
        "b2": 0.1 * jax.random.normal(ks[7], (out_ch,), jnp.float32),
        "gamma2": 1.0 + 0.1 * jax.random.normal(ks[8], (out_ch,), jnp.float32),
        "beta2": 0.1 * jax.random.normal(ks[9], (out_ch,), jnp.float32),
        "mean2": jnp.zeros((out_ch,), jnp.float32),
        "var2": jnp.ones((out_ch,), jnp.float32),
    }
    return params


if __name__ == "__main__":
    # Small shapes: in_ch=4, mid_ch=4, out_ch=8 -> input has in_ch+mid_ch=8 channels.
    in_ch, mid_ch, out_ch = 4, 4, 8
    N, H, W = 2, 16, 16

    key = jax.random.PRNGKey(0)
    k_x, k_p = jax.random.split(key)
    x = jax.random.normal(k_x, (N, in_ch + mid_ch, H, W), jnp.float32)  # NCHW like PyTorch
    params = init_params(k_p, in_ch, mid_ch, out_ch)

    ref = double_conv_reference(x, params)

    # f32 HBM storage (default): tight correctness check.
    out = jax.block_until_ready(double_conv_pallas(x, params))
    assert out.shape == (N, out_ch, H, W), out.shape
    max_err = float(jnp.max(jnp.abs(out - ref)))
    assert jnp.allclose(out, ref, atol=1e-3, rtol=1e-3), max_err

    # bf16 HBM storage (recommended on v6e/v7x): f32 accumulation, looser tolerance.
    out_bf16 = jax.block_until_ready(
        double_conv_pallas(x, params, storage_dtype=jnp.bfloat16))
    max_err_bf16 = float(jnp.max(jnp.abs(out_bf16 - ref)))
    assert jnp.allclose(out_bf16, ref, atol=5e-2, rtol=5e-2), max_err_bf16

    print("KERNEL_OK")
</pallas_src>

<mosaic_0001>
module attributes {stable_mosaic.version = 11 : i64} {
  func.func @_double_conv_kernel(%arg0: i32, %arg1: memref<1x8x256xf32, #tpu.memory_space<vmem>>, %arg2: memref<4x8xf32, #tpu.memory_space<vmem>>, %arg3: memref<4x1xf32, #tpu.memory_space<vmem>>, %arg4: memref<9x8x4xf32, #tpu.memory_space<vmem>>, %arg5: memref<8x1xf32, #tpu.memory_space<vmem>>, %arg6: memref<1x8x256xf32, #tpu.memory_space<vmem>>, %arg7: memref<4x18x18xf32, #tpu.memory_space<vmem>>) attributes {dimension_semantics = [#tpu.dimension_semantics<parallel>], iteration_bounds = array<i64: 2>, scalar_prefetch = 0 : i64, scratch_operands = 1 : i64, tpu.core_type = #tpu.core_type<tc>, window_params = [{transform_indices = @transform_0, window_bounds = array<i64: 1, 8, 256>}, {pipeline_mode = #tpu.pipeline_mode<synchronous>, transform_indices = @transform_1, window_bounds = array<i64: 4, 8>}, {pipeline_mode = #tpu.pipeline_mode<synchronous>, transform_indices = @transform_2, window_bounds = array<i64: 4, 1>}, {pipeline_mode = #tpu.pipeline_mode<synchronous>, transform_indices = @transform_3, window_bounds = array<i64: 9, 8, 4>}, {pipeline_mode = #tpu.pipeline_mode<synchronous>, transform_indices = @transform_4, window_bounds = array<i64: 8, 1>}, {transform_indices = @transform_5, window_bounds = array<i64: 1, 8, 256>}]} {
    %c0 = arith.constant 0 : index
    %c0_0 = arith.constant 0 : index
    %c0_1 = arith.constant 0 : index
    %0 = vector.load %arg1[%c0, %c0_0, %c0_1] : memref<1x8x256xf32, #tpu.memory_space<vmem>>, vector<1x8x256xf32>
    %1 = vector.shape_cast %0 : vector<1x8x256xf32> to vector<8x256xf32>
    %c0_2 = arith.constant 0 : index
    %c0_3 = arith.constant 0 : index
    %2 = vector.load %arg2[%c0_2, %c0_3] : memref<4x8xf32, #tpu.memory_space<vmem>>, vector<4x8xf32>
    %cst = arith.constant dense<0.000000e+00> : vector<4x256xf32>
    %3 = tpu.matmul %2, %1, %cst {dimension_numbers = #tpu.dot_dimension_numbers<[1], [0], [0], [1], [0, 0, 1, 1], [], []>} : vector<4x8xf32>, vector<8x256xf32>, vector<4x256xf32> -> vector<4x256xf32>
    %c0_4 = arith.constant 0 : index
    %c0_5 = arith.constant 0 : index
    %4 = vector.load %arg3[%c0_4, %c0_5] : memref<4x1xf32, #tpu.memory_space<vmem>>, vector<4x1xf32>
    %5 = vector.broadcast %4 : vector<4x1xf32> to vector<4x256xf32>
    %6 = arith.addf %3, %5 : vector<4x256xf32>
    %cst_6 = arith.constant 0.000000e+00 : f32
    %7 = vector.broadcast %cst_6 : f32 to vector<4x256xf32>
    %8 = arith.maximumf %6, %7 : vector<4x256xf32>
    %cst_7 = arith.constant 0.000000e+00 : f32
    %9 = vector.broadcast %cst_7 : f32 to vector<4x18x18xf32>
    %c0_8 = arith.constant 0 : index
    %c0_9 = arith.constant 0 : index
    %c0_10 = arith.constant 0 : index
    %10 = vector.load %arg7[%c0_8, %c0_9, %c0_10] : memref<4x18x18xf32, #tpu.memory_space<vmem>>, vector<4x18x18xf32>
    tpu.vector_store %arg7[%c0_8, %c0_9, %c0_10], %9 {strides = array<i32>} : memref<4x18x18xf32, #tpu.memory_space<vmem>>, vector<4x18x18xf32>,
    %11 = vector.shape_cast %8 : vector<4x256xf32> to vector<4x16x16xf32>
    %c0_11 = arith.constant 0 : index
    %c1 = arith.constant 1 : index
    %c1_12 = arith.constant 1 : index
    %12 = vector.load %arg7[%c0_11, %c1, %c1_12] : memref<4x18x18xf32, #tpu.memory_space<vmem>>, vector<4x16x16xf32>
    tpu.vector_store %arg7[%c0_11, %c1, %c1_12], %11 {strides = array<i32>} : memref<4x18x18xf32, #tpu.memory_space<vmem>>, vector<4x16x16xf32>,
    %cst_13 = arith.constant 0.000000e+00 : f32
    %13 = vector.broadcast %cst_13 : f32 to vector<8x256xf32>
    %c0_14 = arith.constant 0 : index
    %c0_15 = arith.constant 0 : index
    %c0_16 = arith.constant 0 : index
    %14 = vector.load %arg7[%c0_14, %c0_15, %c0_16] : memref<4x18x18xf32, #tpu.memory_space<vmem>>, vector<4x16x16xf32>
    %15 = vector.shape_cast %14 : vector<4x16x16xf32> to vector<4x256xf32>
    %c0_17 = arith.constant 0 : index
    %c0_18 = arith.constant 0 : index
    %c0_19 = arith.constant 0 : index
    %16 = vector.load %arg4[%c0_17, %c0_18, %c0_19] : memref<9x8x4xf32, #tpu.memory_space<vmem>>, vector<1x8x4xf32>
    %17 = vector.shape_cast %16 : vector<1x8x4xf32> to vector<8x4xf32>
    %cst_20 = arith.constant dense<0.000000e+00> : vector<8x256xf32>
    %18 = tpu.matmul %17, %15, %cst_20 {dimension_numbers = #tpu.dot_dimension_numbers<[1], [0], [0], [1], [0, 0, 1, 1], [], []>} : vector<8x4xf32>, vector<4x256xf32>, vector<8x256xf32> -> vector<8x256xf32>
    %19 = arith.addf %13, %18 : vector<8x256xf32>
    %c0_21 = arith.constant 0 : index
    %c0_22 = arith.constant 0 : index
    %c1_23 = arith.constant 1 : index
    %20 = vector.load %arg7[%c0_21, %c0_22, %c1_23] : memref<4x18x18xf32, #tpu.memory_space<vmem>>, vector<4x16x16xf32>
    %21 = vector.shape_cast %20 : vector<4x16x16xf32> to vector<4x256xf32>
    %c1_24 = arith.constant 1 : index
    %c0_25 = arith.constant 0 : index
    %c0_26 = arith.constant 0 : index
    %22 = vector.load %arg4[%c1_24, %c0_25, %c0_26] : memref<9x8x4xf32, #tpu.memory_space<vmem>>, vector<1x8x4xf32>
    %23 = vector.shape_cast %22 : vector<1x8x4xf32> to vector<8x4xf32>
    %cst_27 = arith.constant dense<0.000000e+00> : vector<8x256xf32>
    %24 = tpu.matmul %23, %21, %cst_27 {dimension_numbers = #tpu.dot_dimension_numbers<[1], [0], [0], [1], [0, 0, 1, 1], [], []>} : vector<8x4xf32>, vector<4x256xf32>, vector<8x256xf32> -> vector<8x256xf32>
    %25 = arith.addf %19, %24 : vector<8x256xf32>
    %c0_28 = arith.constant 0 : index
    %c0_29 = arith.constant 0 : index
    %c2 = arith.constant 2 : index
    %26 = vector.load %arg7[%c0_28, %c0_29, %c2] : memref<4x18x18xf32, #tpu.memory_space<vmem>>, vector<4x16x16xf32>
    %27 = vector.shape_cast %26 : vector<4x16x16xf32> to vector<4x256xf32>
    %c2_30 = arith.constant 2 : index
    %c0_31 = arith.constant 0 : index
    %c0_32 = arith.constant 0 : index
    %28 = vector.load %arg4[%c2_30, %c0_31, %c0_32] : memref<9x8x4xf32, #tpu.memory_space<vmem>>, vector<1x8x4xf32>
    %29 = vector.shape_cast %28 : vector<1x8x4xf32> to vector<8x4xf32>
    %cst_33 = arith.constant dense<0.000000e+00> : vector<8x256xf32>
    %30 = tpu.matmul %29, %27, %cst_33 {dimension_numbers = #tpu.dot_dimension_numbers<[1], [0], [0], [1], [0, 0, 1, 1], [], []>} : vector<8x4xf32>, vector<4x256xf32>, vector<8x256xf32> -> vector<8x256xf32>
    %31 = arith.addf %25, %30 : vector<8x256xf32>
    %c0_34 = arith.constant 0 : index
    %c1_35 = arith.constant 1 : index
    %c0_36 = arith.constant 0 : index
    %32 = vector.load %arg7[%c0_34, %c1_35, %c0_36] : memref<4x18x18xf32, #tpu.memory_space<vmem>>, vector<4x16x16xf32>
    %33 = vector.shape_cast %32 : vector<4x16x16xf32> to vector<4x256xf32>
    %c3 = arith.constant 3 : index
    %c0_37 = arith.constant 0 : index
    %c0_38 = arith.constant 0 : index
    %34 = vector.load %arg4[%c3, %c0_37, %c0_38] : memref<9x8x4xf32, #tpu.memory_space<vmem>>, vector<1x8x4xf32>
    %35 = vector.shape_cast %34 : vector<1x8x4xf32> to vector<8x4xf32>
    %cst_39 = arith.constant dense<0.000000e+00> : vector<8x256xf32>
    %36 = tpu.matmul %35, %33, %cst_39 {dimension_numbers = #tpu.dot_dimension_numbers<[1], [0], [0], [1], [0, 0, 1, 1], [], []>} : vector<8x4xf32>, vector<4x256xf32>, vector<8x256xf32> -> vector<8x256xf32>
    %37 = arith.addf %31, %36 : vector<8x256xf32>
    %c0_40 = arith.constant 0 : index
    %c1_41 = arith.constant 1 : index
    %c1_42 = arith.constant 1 : index
    %38 = vector.load %arg7[%c0_40, %c1_41, %c1_42] : memref<4x18x18xf32, #tpu.memory_space<vmem>>, vector<4x16x16xf32>
    %39 = vector.shape_cast %38 : vector<4x16x16xf32> to vector<4x256xf32>
    %c4 = arith.constant 4 : index
    %c0_43 = arith.constant 0 : index
    %c0_44 = arith.constant 0 : index
    %40 = vector.load %arg4[%c4, %c0_43, %c0_44] : memref<9x8x4xf32, #tpu.memory_space<vmem>>, vector<1x8x4xf32>
    %41 = vector.shape_cast %40 : vector<1x8x4xf32> to vector<8x4xf32>
    %cst_45 = arith.constant dense<0.000000e+00> : vector<8x256xf32>
    %42 = tpu.matmul %41, %39, %cst_45 {dimension_numbers = #tpu.dot_dimension_numbers<[1], [0], [0], [1], [0, 0, 1, 1], [], []>} : vector<8x4xf32>, vector<4x256xf32>, vector<8x256xf32> -> vector<8x256xf32>
    %43 = arith.addf %37, %42 : vector<8x256xf32>
    %c0_46 = arith.constant 0 : index
    %c1_47 = arith.constant 1 : index
    %c2_48 = arith.constant 2 : index
    %44 = vector.load %arg7[%c0_46, %c1_47, %c2_48] : memref<4x18x18xf32, #tpu.memory_space<vmem>>, vector<4x16x16xf32>
    %45 = vector.shape_cast %44 : vector<4x16x16xf32> to vector<4x256xf32>
    %c5 = arith.constant 5 : index
    %c0_49 = arith.constant 0 : index
    %c0_50 = arith.constant 0 : index
    %46 = vector.load %arg4[%c5, %c0_49, %c0_50] : memref<9x8x4xf32, #tpu.memory_space<vmem>>, vector<1x8x4xf32>
    %47 = vector.shape_cast %46 : vector<1x8x4xf32> to vector<8x4xf32>
    %cst_51 = arith.constant dense<0.000000e+00> : vector<8x256xf32>
    %48 = tpu.matmul %47, %45, %cst_51 {dimension_numbers = #tpu.dot_dimension_numbers<[1], [0], [0], [1], [0, 0, 1, 1], [], []>} : vector<8x4xf32>, vector<4x256xf32>, vector<8x256xf32> -> vector<8x256xf32>
    %49 = arith.addf %43, %48 : vector<8x256xf32>
    %c0_52 = arith.constant 0 : index
    %c2_53 = arith.constant 2 : index
    %c0_54 = arith.constant 0 : index
    %50 = vector.load %arg7[%c0_52, %c2_53, %c0_54] : memref<4x18x18xf32, #tpu.memory_space<vmem>>, vector<4x16x16xf32>
    %51 = vector.shape_cast %50 : vector<4x16x16xf32> to vector<4x256xf32>
    %c6 = arith.constant 6 : index
    %c0_55 = arith.constant 0 : index
    %c0_56 = arith.constant 0 : index
    %52 = vector.load %arg4[%c6, %c0_55, %c0_56] : memref<9x8x4xf32, #tpu.memory_space<vmem>>, vector<1x8x4xf32>
    %53 = vector.shape_cast %52 : vector<1x8x4xf32> to vector<8x4xf32>
    %cst_57 = arith.constant dense<0.000000e+00> : vector<8x256xf32>
    %54 = tpu.matmul %53, %51, %cst_57 {dimension_numbers = #tpu.dot_dimension_numbers<[1], [0], [0], [1], [0, 0, 1, 1], [], []>} : vector<8x4xf32>, vector<4x256xf32>, vector<8x256xf32> -> vector<8x256xf32>
    %55 = arith.addf %49, %54 : vector<8x256xf32>
    %c0_58 = arith.constant 0 : index
    %c2_59 = arith.constant 2 : index
    %c1_60 = arith.constant 1 : index
    %56 = vector.load %arg7[%c0_58, %c2_59, %c1_60] : memref<4x18x18xf32, #tpu.memory_space<vmem>>, vector<4x16x16xf32>
    %57 = vector.shape_cast %56 : vector<4x16x16xf32> to vector<4x256xf32>
    %c7 = arith.constant 7 : index
    %c0_61 = arith.constant 0 : index
    %c0_62 = arith.constant 0 : index
    %58 = vector.load %arg4[%c7, %c0_61, %c0_62] : memref<9x8x4xf32, #tpu.memory_space<vmem>>, vector<1x8x4xf32>
    %59 = vector.shape_cast %58 : vector<1x8x4xf32> to vector<8x4xf32>
    %cst_63 = arith.constant dense<0.000000e+00> : vector<8x256xf32>
    %60 = tpu.matmul %59, %57, %cst_63 {dimension_numbers = #tpu.dot_dimension_numbers<[1], [0], [0], [1], [0, 0, 1, 1], [], []>} : vector<8x4xf32>, vector<4x256xf32>, vector<8x256xf32> -> vector<8x256xf32>
    %61 = arith.addf %55, %60 : vector<8x256xf32>
    %c0_64 = arith.constant 0 : index
    %c2_65 = arith.constant 2 : index
    %c2_66 = arith.constant 2 : index
    %62 = vector.load %arg7[%c0_64, %c2_65, %c2_66] : memref<4x18x18xf32, #tpu.memory_space<vmem>>, vector<4x16x16xf32>
    %63 = vector.shape_cast %62 : vector<4x16x16xf32> to vector<4x256xf32>
    %c8 = arith.constant 8 : index
    %c0_67 = arith.constant 0 : index
    %c0_68 = arith.constant 0 : index
    %64 = vector.load %arg4[%c8, %c0_67, %c0_68] : memref<9x8x4xf32, #tpu.memory_space<vmem>>, vector<1x8x4xf32>
    %65 = vector.shape_cast %64 : vector<1x8x4xf32> to vector<8x4xf32>
    %cst_69 = arith.constant dense<0.000000e+00> : vector<8x256xf32>
    %66 = tpu.matmul %65, %63, %cst_69 {dimension_numbers = #tpu.dot_dimension_numbers<[1], [0], [0], [1], [0, 0, 1, 1], [], []>} : vector<8x4xf32>, vector<4x256xf32>, vector<8x256xf32> -> vector<8x256xf32>
    %67 = arith.addf %61, %66 : vector<8x256xf32>
    %c0_70 = arith.constant 0 : index
    %c0_71 = arith.constant 0 : index
    %68 = vector.load %arg5[%c0_70, %c0_71] : memref<8x1xf32, #tpu.memory_space<vmem>>, vector<8x1xf32>
    %69 = vector.broadcast %68 : vector<8x1xf32> to vector<8x256xf32>
    %70 = arith.addf %67, %69 : vector<8x256xf32>
    %cst_72 = arith.constant 0.000000e+00 : f32
    %71 = vector.broadcast %cst_72 : f32 to vector<8x256xf32>
    %72 = arith.maximumf %70, %71 : vector<8x256xf32>
    %c0_73 = arith.constant 0 : index
    %c0_74 = arith.constant 0 : index
    %c0_75 = arith.constant 0 : index
    %73 = vector.load %arg6[%c0_73, %c0_74, %c0_75] : memref<1x8x256xf32, #tpu.memory_space<vmem>>, vector<1x8x256xf32>
    %74 = vector.shape_cast %73 : vector<1x8x256xf32> to vector<8x256xf32>
    %75 = vector.shape_cast %72 : vector<8x256xf32> to vector<1x8x256xf32>
    tpu.vector_store %arg6[%c0_73, %c0_74, %c0_75], %75 {strides = array<i32>} : memref<1x8x256xf32, #tpu.memory_space<vmem>>, vector<1x8x256xf32>,
    return
  }
  func.func @transform_0(%arg0: i32) -> (i32, i32, i32) {
    %c0_i32 = arith.constant 0 : i32
    %c0_i32_0 = arith.constant 0 : i32
    %c0_i32_1 = arith.constant 0 : i32
    return %arg0, %c0_i32, %c0_i32_0 : i32, i32, i32
  }
  func.func @transform_1(%arg0: i32) -> (i32, i32) {
    %c0_i32 = arith.constant 0 : i32
    %c0_i32_0 = arith.constant 0 : i32
    %c0_i32_1 = arith.constant 0 : i32
    return %c0_i32, %c0_i32_0 : i32, i32
  }
  func.func @transform_2(%arg0: i32) -> (i32, i32) {
    %c0_i32 = arith.constant 0 : i32
    %c0_i32_0 = arith.constant 0 : i32
    %c0_i32_1 = arith.constant 0 : i32
    return %c0_i32, %c0_i32_0 : i32, i32
  }
  func.func @transform_3(%arg0: i32) -> (i32, i32, i32) {
    %c0_i32 = arith.constant 0 : i32
    %c0_i32_0 = arith.constant 0 : i32
    %c0_i32_1 = arith.constant 0 : i32
    %c0_i32_2 = arith.constant 0 : i32
    return %c0_i32, %c0_i32_0, %c0_i32_1 : i32, i32, i32
  }
  func.func @transform_4(%arg0: i32) -> (i32, i32) {
    %c0_i32 = arith.constant 0 : i32
    %c0_i32_0 = arith.constant 0 : i32
    %c0_i32_1 = arith.constant 0 : i32
    return %c0_i32, %c0_i32_0 : i32, i32
  }
  func.func @transform_5(%arg0: i32) -> (i32, i32, i32) {
    %c0_i32 = arith.constant 0 : i32
    %c0_i32_0 = arith.constant 0 : i32
    %c0_i32_1 = arith.constant 0 : i32
    return %arg0, %c0_i32, %c0_i32_0 : i32, i32, i32
  }
}

</mosaic_0001>

<llo_original>
// kernel: tpu_custom_call.1
$region0: #{tpu_custom_call.1}
  #allocation0 [shape = 'u32[]', space=smem, size = 0x4, offset = 0x4, fixed_abs, tag = 'smem constant byte address 0x4 - core index']
  #allocation1 [shape = 'u32[72,128]{1,0:T(1,128)}', space=vmem, size = 0x9000, scoped, tag = 'internal scratch']
  #allocation2 [shape = 'f32[4,18,18]{2,1,0:T(8,128)}', space=vmem, size = 0xc000, scoped, tag = 'scratch operand']
  %s0 = inlined_call_operand.vmem [shape: f32[2,8,256], index: 0, kind: input, shape index: {}]
  %s1 = inlined_call_operand.vmem [shape: f32[4,8], index: 1, kind: input, shape index: {}]
  %s2 = inlined_call_operand.vmem [shape: f32[4,1], index: 2, kind: input, shape index: {}]
  %s3 = inlined_call_operand.vmem [shape: f32[9,8,4], index: 3, kind: input, shape index: {}]
  %s4 = inlined_call_operand.vmem [shape: f32[8,1], index: 4, kind: input, shape index: {}]
  %s5 = inlined_call_operand.hbm [shape: f32[2,8,256], index: 5, kind: output, shape index: {}]
  %s6 = sld [smem:[#allocation0]]
  $region53: #{tpu_custom_call.1} parent=0
    _
  %s8 = ssub.s32 1, %s6
  %s9 = scalar_select 0, %s8, %s6
  $region1: #{tpu_custom_call.1} parent=0
    #allocation3 [shape = 'u8[16384]{0}', space=vmem, size = 0x4000, scoped, tag = 'output window, operand 0']
    #allocation4 [shape = 's32[2]{0}', space=sflag, size = 0x8, scoped, tag = 'scoped memory for tpu_custom_call.1']
    %10 = vsyncpa [#allocation4], 0
    %s11 = scalar_lea.sflag [#allocation4], 1
    %12 = vsyncpa %s11, 0
    loop: start=0, step=1, limit=4
    $region2: #{tpu_custom_call.1} parent=1 // loop_pre_header
      _
    $region3: #{tpu_custom_call.1} parent=1 // loop_header
      %s14 = sphi 0, %s18
      %p15 = scmp.ge.s32.totalorder %s14, 4
      %s24 = sphi 0, %s26
      %s27 = sphi 0, %s24
      %s28 = sphi 0, %s27
      %s44 = sphi 0, %s28
      %s48 = sphi 0, %s48
      %s50 = sphi 0, %s48
      %s51 = sphi 0, %s50
      %s65 = sphi 0, %s51
      %s69 = sphi 0, %s69
      %s71 = sphi 0, %s69
      %s72 = sphi 0, %s71
      %s86 = sphi 0, %s72
      %s90 = sphi 0, %s90
      %s92 = sphi 0, %s90
      %s93 = sphi 0, %s92
      %s107 = sphi 0, %s93
      %s111 = sphi 0, %s111
      %s113 = sphi 0, %s111
      %s114 = sphi 0, %s113
      %s128 = sphi 0, %s114
      %s134 = sphi 0, %s136
      %s137 = sphi 0, %s134
      %s138 = sphi 0, %s137
      %s154 = sphi 0, %s138
    $region4: #{tpu_custom_call.1} parent=1 // loop_header_branch
      %17 = sbr.rel (%p15) target = $region8
    $region5: #{tpu_custom_call.1} parent=1 // loop_body
      %s19 = ssub.s32 %s14, 1
      %s20 = ssub.s32 %s14, 2
      %s21 = sadd.s32 %s14, 1
      %s22 = ssub.s32 %s14, %s21
      %p23 = scmp.eq.s32.totalorder %s22, 0
      %s25 = sadd.s32 %s24, 1
      %s26 = scalar_select %p23, %s24, %s25
      %p29 = pneg %p23
      %p30 = scmp.eq.s32.totalorder %s14, 1
      %p31 = por %p29, %p30
      %p32 = scmp.ne.s32.totalorder %s24, %s27
      %p33 = scmp.eq.s32.totalorder %s14, 0
      %p34 = por %p32, %p33
      %p35 = scmp.ne.s32.totalorder %s24, %s27
      %p36 = scmp.eq.s32.totalorder %s19, 1
      %p37 = por %p35, %p36
      %p38 = scmp.ne.s32.totalorder %s27, %s28
      %p39 = scmp.eq.s32.totalorder %s19, 0
      %p40 = por %p38, %p39
      %p41 = scmp.ne.s32.totalorder %s27, %s28
      %p42 = scmp.eq.s32.totalorder %s20, 1
      %p43 = por %p41, %p42
      %p45 = scmp.ne.s32.totalorder %s28, %s44
      %p46 = scmp.eq.s32.totalorder %s20, 0
      %p47 = por %p45, %p46
      %s49 = sadd.s32 %s48, 1
      %p52 = scmp.eq.s32.totalorder %s14, 1
      %p53 = scmp.ne.s32.totalorder %s48, %s50
      %p54 = scmp.eq.s32.totalorder %s14, 0
      %p55 = por %p53, %p54
      %p56 = scmp.ne.s32.totalorder %s48, %s50
      %p57 = scmp.eq.s32.totalorder %s19, 1
      %p58 = por %p56, %p57
      %p59 = scmp.ne.s32.totalorder %s50, %s51
      %p60 = scmp.eq.s32.totalorder %s19, 0
      %p61 = por %p59, %p60
      %p62 = scmp.ne.s32.totalorder %s50, %s51
      %p63 = scmp.eq.s32.totalorder %s20, 1
      %p64 = por %p62, %p63
      %p66 = scmp.ne.s32.totalorder %s51, %s65
      %p67 = scmp.eq.s32.totalorder %s20, 0
      %p68 = por %p66, %p67
      %s70 = sadd.s32 %s69, 1
      %p73 = scmp.eq.s32.totalorder %s14, 1
      %p74 = scmp.ne.s32.totalorder %s69, %s71
      %p75 = scmp.eq.s32.totalorder %s14, 0
      %p76 = por %p74, %p75
      %p77 = scmp.ne.s32.totalorder %s69, %s71
      %p78 = scmp.eq.s32.totalorder %s19, 1
      %p79 = por %p77, %p78
      %p80 = scmp.ne.s32.totalorder %s71, %s72
      %p81 = scmp.eq.s32.totalorder %s19, 0
      %p82 = por %p80, %p81
      %p83 = scmp.ne.s32.totalorder %s71, %s72
      %p84 = scmp.eq.s32.totalorder %s20, 1
      %p85 = por %p83, %p84
      %p87 = scmp.ne.s32.totalorder %s72, %s86
      %p88 = scmp.eq.s32.totalorder %s20, 0
      %p89 = por %p87, %p88
      %s91 = sadd.s32 %s90, 1
      %p94 = scmp.eq.s32.totalorder %s14, 1
      %p95 = scmp.ne.s32.totalorder %s90, %s92
      %p96 = scmp.eq.s32.totalorder %s14, 0
      %p97 = por %p95, %p96
      %p98 = scmp.ne.s32.totalorder %s90, %s92
      %p99 = scmp.eq.s32.totalorder %s19, 1
      %p100 = por %p98, %p99
      %p101 = scmp.ne.s32.totalorder %s92, %s93
      %p102 = scmp.eq.s32.totalorder %s19, 0
      %p103 = por %p101, %p102
      %p104 = scmp.ne.s32.totalorder %s92, %s93
      %p105 = scmp.eq.s32.totalorder %s20, 1
      %p106 = por %p104, %p105
      %p108 = scmp.ne.s32.totalorder %s93, %s107
      %p109 = scmp.eq.s32.totalorder %s20, 0
      %p110 = por %p108, %p109
      %s112 = sadd.s32 %s111, 1
      %p115 = scmp.eq.s32.totalorder %s14, 1
      %p116 = scmp.ne.s32.totalorder %s111, %s113
      %p117 = scmp.eq.s32.totalorder %s14, 0
      %p118 = por %p116, %p117
      %p119 = scmp.ne.s32.totalorder %s111, %s113
      %p120 = scmp.eq.s32.totalorder %s19, 1
      %p121 = por %p119, %p120
      %p122 = scmp.ne.s32.totalorder %s113, %s114
      %p123 = scmp.eq.s32.totalorder %s19, 0
      %p124 = por %p122, %p123
      %p125 = scmp.ne.s32.totalorder %s113, %s114
      %p126 = scmp.eq.s32.totalorder %s20, 1
      %p127 = por %p125, %p126
      %p129 = scmp.ne.s32.totalorder %s114, %s128
      %p130 = scmp.eq.s32.totalorder %s20, 0
      %p131 = por %p129, %p130
      %s132 = ssub.s32 %s14, %s21
      %p133 = scmp.eq.s32.totalorder %s132, 0
      %s135 = sadd.s32 %s134, 1
      %s136 = scalar_select %p133, %s134, %s135
      %p139 = pneg %p133
      %p140 = scmp.eq.s32.totalorder %s14, 1
      %p141 = por %p139, %p140
      %p142 = scmp.ne.s32.totalorder %s134, %s137
      %p143 = scmp.eq.s32.totalorder %s14, 0
      %p144 = por %p142, %p143
      %p145 = scmp.ne.s32.totalorder %s134, %s137
      %p146 = scmp.eq.s32.totalorder %s19, 1
      %p147 = por %p145, %p146
      %p148 = scmp.ne.s32.totalorder %s137, %s138
      %p149 = scmp.eq.s32.totalorder %s19, 0
      %p150 = por %p148, %p149
      %p151 = scmp.ne.s32.totalorder %s137, %s138
      %p152 = scmp.eq.s32.totalorder %s20, 1
      %p153 = por %p151, %p152
      %p155 = scmp.ne.s32.totalorder %s138, %s154
      %p156 = scmp.eq.s32.totalorder %s20, 0
      %p157 = por %p155, %p156
      %p158 = scmp.le.s32.totalorder 1, %s14
      %p159 = scmp.lt.s32.totalorder %s14, 3
      %p160 = pnand %p158, %p159
      %p161 = pneg %p160
      // Predicated region
      $region9: #{tpu_custom_call.1} parent=5 // pred_check
        _
      $region10: #{tpu_custom_call.1} parent=5 // pred_check_branch
        %163 = sbr.rel (%p160) target = $region12
      $region11: #{tpu_custom_call.1} parent=5 // pred_region
        %s164 = ssub.s32 %s14, 1
        // Predicated region
        $region13: #{tpu_custom_call.1} parent=11 // pred_check
          %p165 = pneg %p61
        $region14: #{tpu_custom_call.1} parent=11 // pred_check_branch
          %167 = sbr.rel (%p165) target = $region16
        $region15: #{tpu_custom_call.1} parent=11 // pred_region
          _
        $region16: #{tpu_custom_call.1} parent=11 // pred_fallthru
          _
        // Predicated region
        $region17: #{tpu_custom_call.1} parent=11 // pred_check
          %p168 = pneg %p82
        $region18: #{tpu_custom_call.1} parent=11 // pred_check_branch
          %170 = sbr.rel (%p168) target = $region20
        $region19: #{tpu_custom_call.1} parent=11 // pred_region
          _
        $region20: #{tpu_custom_call.1} parent=11 // pred_fallthru
          _
        // Predicated region
        $region21: #{tpu_custom_call.1} parent=11 // pred_check
          %p171 = pneg %p103
        $region22: #{tpu_custom_call.1} parent=11 // pred_check_branch
          %173 = sbr.rel (%p171) target = $region24
        $region23: #{tpu_custom_call.1} parent=11 // pred_region
          _
        $region24: #{tpu_custom_call.1} parent=11 // pred_fallthru
          _
        // Predicated region
        $region25: #{tpu_custom_call.1} parent=11 // pred_check
          %p174 = pneg %p124
        $region26: #{tpu_custom_call.1} parent=11 // pred_check_branch
          %176 = sbr.rel (%p174) target = $region28
        $region27: #{tpu_custom_call.1} parent=11 // pred_region
          _
        $region28: #{tpu_custom_call.1} parent=11 // pred_fallthru
          _
      $region12: #{tpu_custom_call.1} parent=5 // pred_fallthru
        _
      %p177 = scmp.lt.s32.totalorder %s14, 2
      // Predicated region
      $region29: #{tpu_custom_call.1} parent=5 // pred_check
        %p178 = pneg %p177
      $region30: #{tpu_custom_call.1} parent=5 // pred_check_branch
        %180 = sbr.rel (%p178) target = $region32
      $region31: #{tpu_custom_call.1} parent=5 // pred_region
        // Predicated region
        $region33: #{tpu_custom_call.1} parent=31 // pred_check
          %p181 = pneg %p34
        $region34: #{tpu_custom_call.1} parent=31 // pred_check_branch
          %183 = sbr.rel (%p181) target = $region36
        $region35: #{tpu_custom_call.1} parent=31 // pred_region
          %p184 = scmp.lt.s32.totalorder %s14, 1
          %s185 = scalar_select %p184, %s14, 1
          %s186 = smul.addr %s185, 2
          %s187 = smul.addr %s186, 8
          %s188 = scalar_lea.vmem %s0, %s187
        $region36: #{tpu_custom_call.1} parent=31 // pred_fallthru
          _
      $region32: #{tpu_custom_call.1} parent=5 // pred_fallthru
        _
      %p189 = scmp.le.s32.totalorder 1, %s14
      %p190 = scmp.lt.s32.totalorder %s14, 3
      %p191 = pnand %p189, %p190
      %p192 = pneg %p191
      // Predicated region
      $region37: #{tpu_custom_call.1} parent=5 // pred_check
        _
      $region38: #{tpu_custom_call.1} parent=5 // pred_check_branch
        %194 = sbr.rel (%p191) target = $region40
      $region39: #{tpu_custom_call.1} parent=5 // pred_region
        %s195 = ssub.s32 %s14, 1
        %p196 = scmp.lt.s32.totalorder %s19, 1
        %s197 = scalar_select %p196, %s19, 1
        %s198 = smul.addr %s197, 2
        %s199 = smul.addr %s198, 8
        %s200 = scalar_lea.vmem %s0, %s199
        %p201 = pneg %p40
        %p202 = pneg %p37
        %p203 = pneg %p61
        %p204 = pneg %p58
        %p205 = pneg %p82
        %p206 = pneg %p79
        %p207 = pneg %p103
        %p208 = pneg %p100
        %p209 = pneg %p124
        %p210 = pneg %p121
        %p211 = pneg %p150
        %p212 = pneg %p147
        %s213 = sand.u32 %s137, 1
        %s214 = scalar_lea.sflag [#allocation4], %s213
        %s215 = sand.u32 %s137, 1
        %s216 = smul.addr %s215, 16
        %s217 = scalar_lea.vmem [#allocation3], %s216
        %p218 = scmp.lt.s32.totalorder %s19, 1
        %s219 = scalar_select %p218, %s19, 1
        %s220 = smul.addr %s219, 2
        %s221 = smul.addr %s220, 8
        %s222 = scalar_lea.vmem %s0, %s221
        %v223 = vld [vmem:[%s222] sm:$0xff]
        %v224 = vld [vmem:[%s222 + $0x8] sm:$0xff]
        %v225 = vld [vmem:[%s1] sm:$0xf]
        %v226 = vld [vmem:[%s2] sm:$0xf]
        %228 = vset.pattern.permute.xlu0 0
        %229 = vperm.xlu0 %228, %v226
        %v230 = vpop.permute.xlu0 %229
        %vm232 = vcmask 64512
        %v234 = vsel %vm232, %v225, 0
        %236 = vmatpush.msra.mxu0 0.0
        %237 = vmatpush.msra.mxu0 0.0
        %238 = vmatpush.msra.mxu0 0.0
        %239 = vmatpush.msra.mxu0 0.0
        %240 = vmatpush.msra.mxu0 0.0
        %241 = vmatpush.msra.mxu0 0.0
        %242 = vmatpush.msra.mxu0 0.0
        %243 = vmatpush.msra.mxu0 0.0
        %244 = vmatpush.msra.mxu0 0.0
        %245 = vmatpush.msra.mxu0 0.0
        %246 = vmatpush.msra.mxu0 0.0
        %247 = vmatpush.msra.mxu0 0.0
        %248 = vmatpush.msra.mxu0 0.0
        %249 = vmatpush.msra.mxu0 0.0
        %250 = vmatpush.msra.mxu0 0.0
        %251 = vmatpush.msra.mxu0 %v223
        %252 = vmatmul.f32.gmra.mxu0 %v234
        %v253 = vpop.f32.mrf.mxu0
        %v254 = vadd.f32 %v230, %v253
        %255 = vdwg.mxu0
        %256 = vmatpush.msra.mxu0 0.0
        %257 = vmatpush.msra.mxu0 0.0
        %258 = vmatpush.msra.mxu0 0.0
        %259 = vmatpush.msra.mxu0 0.0
        %260 = vmatpush.msra.mxu0 0.0
        %261 = vmatpush.msra.mxu0 0.0
        %262 = vmatpush.msra.mxu0 0.0
        %263 = vmatpush.msra.mxu0 0.0
        %264 = vmatpush.msra.mxu0 0.0
        %265 = vmatpush.msra.mxu0 0.0
        %266 = vmatpush.msra.mxu0 0.0
        %267 = vmatpush.msra.mxu0 0.0
        %268 = vmatpush.msra.mxu0 0.0
        %269 = vmatpush.msra.mxu0 0.0
        %270 = vmatpush.msra.mxu0 0.0
        %271 = vmatpush.msra.mxu0 %v224
        %272 = vmatmul.f32.gmra.mxu0 %v234
        %v273 = vpop.f32.mrf.mxu0
        %v274 = vadd.f32 %v230, %v273
        %275 = vdwg.mxu0
        %v276 = vmax.f32 %v254, 0.0
        %v277 = vmax.f32 %v274, 0.0
        %vm278 = vcmask 146432
        %279 = vst.msk [vmem:[#allocation2] sm:$0xff] %vm278, 0.0
        %280 = vst.msk [vmem:[#allocation2 + $0x8] sm:$0xff] %vm278, 0.0
        %vm281 = vcmask 140288
        %282 = vst.msk [vmem:[#allocation2 + $0x10] sm:$0x3] %vm281, 0.0
        %283 = vst.msk [vmem:[#allocation2 + $0x18] sm:$0xff] %vm278, 0.0
        %284 = vst.msk [vmem:[#allocation2 + $0x20] sm:$0xff] %vm278, 0.0
        %285 = vst.msk [vmem:[#allocation2 + $0x28] sm:$0x3] %vm281, 0.0
        %286 = vst.msk [vmem:[#allocation2 + $0x30] sm:$0xff] %vm278, 0.0
        %287 = vst.msk [vmem:[#allocation2 + $0x38] sm:$0xff] %vm278, 0.0
        %288 = vst.msk [vmem:[#allocation2 + $0x40] sm:$0x3] %vm281, 0.0
        %289 = vst.msk [vmem:[#allocation2 + $0x48] sm:$0xff] %vm278, 0.0
        %290 = vst.msk [vmem:[#allocation2 + $0x50] sm:$0xff] %vm278, 0.0
        %291 = vst.msk [vmem:[#allocation2 + $0x58] sm:$0x3] %vm281, 0.0
        %293 = vrot.lane.b32.xlu0 %v276, 112
        %v294 = vpop.permute.xlu0 %293
        %296 = vrot.lane.b32.xlu0 %v276, 96
        %v297 = vpop.permute.xlu0 %296
        %299 = vrot.lane.b32.xlu0 %v276, 80
        %v300 = vpop.permute.xlu0 %299
        %302 = vrot.lane.b32.xlu0 %v276, 64
        %v303 = vpop.permute.xlu0 %302
        %305 = vrot.lane.b32.xlu0 %v276, 48
        %v306 = vpop.permute.xlu0 %305
        %308 = vrot.lane.b32.xlu0 %v276, 32
        %v309 = vpop.permute.xlu0 %308
        %311 = vrot.lane.b32.xlu0 %v276, 16
        %v312 = vpop.permute.xlu0 %311
        %315 = vrot.lane.b32.xlu0 %v277, 112
        %v316 = vpop.permute.xlu0 %315
        %318 = vrot.lane.b32.xlu0 %v277, 96
        %v319 = vpop.permute.xlu0 %318
        %321 = vrot.lane.b32.xlu0 %v277, 80
        %v322 = vpop.permute.xlu0 %321
        %324 = vrot.lane.b32.xlu0 %v277, 64
        %v325 = vpop.permute.xlu0 %324
        %327 = vrot.lane.b32.xlu0 %v277, 48
        %v328 = vpop.permute.xlu0 %327
        %330 = vrot.lane.b32.xlu0 %v277, 32
        %v331 = vpop.permute.xlu0 %330
        %333 = vrot.lane.b32.xlu0 %v277, 16
        %v334 = vpop.permute.xlu0 %333
        %v336 = vrot.slane %v297, 4
        %vm337 = vcmask 1047556
        %v338 = vsel %vm337, %v336, %v276
        %v340 = vunpack.c.l.s4 1983009808
        %v341 = vunpack.c.0.s8 %v340
        %v342 = vperm.slane %v338, %v341
        %v343 = vrot.slane %v300, 4
        %v344 = vsel %vm337, %v343, %v294
        %v346 = vunpack.c.l.s4 1983009808
        %v347 = vunpack.c.0.s8 %v346
        %v348 = vperm.slane %v344, %v347
        %v349 = vrot.slane %v309, 4
        %v350 = vsel %vm337, %v349, %v303
        %v352 = vunpack.c.l.s4 1983009808
        %v353 = vunpack.c.0.s8 %v352
        %v354 = vperm.slane %v350, %v353
        %v355 = vrot.slane %v312, 4
        %v356 = vsel %vm337, %v355, %v306
        %v358 = vunpack.c.l.s4 1983009808
        %v359 = vunpack.c.0.s8 %v358
        %v360 = vperm.slane %v356, %v359
        %v361 = vrot.slane %v348, 4
        %v362 = vsel %vm337, %v361, %v342
        %v363 = vrot.slane %v342, 4
        %v364 = vsel %vm337, %v348, %v363
        %v366 = vunpack.c.l.s4 1934713408
        %v367 = vunpack.c.0.s8 %v366
        %v368 = vperm.slane %v362, %v367
        %v370 = vunpack.c.l.s4 1934713408
        %v371 = vunpack.c.0.s8 %v370
        %v372 = vperm.slane %v364, %v371
        %v373 = vrot.slane %v360, 4
        %v374 = vsel %vm337, %v373, %v354
        %v375 = vrot.slane %v354, 4
        %v376 = vsel %vm337, %v360, %v375
        %v378 = vunpack.c.l.s4 1934713408
        %v379 = vunpack.c.0.s8 %v378
        %v380 = vperm.slane %v374, %v379
        %v382 = vunpack.c.l.s4 1934713408
        %v383 = vunpack.c.0.s8 %v382
        %v384 = vperm.slane %v376, %v383
        %v385 = vrot.slane %v380, 4
        %v386 = vsel %vm337, %v385, %v368
        %v387 = vrot.slane %v368, 4
        %v388 = vsel %vm337, %v380, %v387
        %v389 = vrot.slane %v384, 4
        %v390 = vsel %vm337, %v389, %v372
        %v391 = vrot.slane %v372, 4
        %v392 = vsel %vm337, %v384, %v391
        %v393 = vrot.slane %v319, 4
        %v394 = vsel %vm337, %v393, %v277
        %v396 = vunpack.c.l.s4 1983009808
        %v397 = vunpack.c.0.s8 %v396
        %v398 = vperm.slane %v394, %v397
        %v399 = vrot.slane %v322, 4
        %v400 = vsel %vm337, %v399, %v316
        %v402 = vunpack.c.l.s4 1983009808
        %v403 = vunpack.c.0.s8 %v402
        %v404 = vperm.slane %v400, %v403
        %v405 = vrot.slane %v331, 4
        %v406 = vsel %vm337, %v405, %v325
        %v408 = vunpack.c.l.s4 1983009808
        %v409 = vunpack.c.0.s8 %v408
        %v410 = vperm.slane %v406, %v409
        %v411 = vrot.slane %v334, 4
        %v412 = vsel %vm337, %v411, %v328
        %v414 = vunpack.c.l.s4 1983009808
        %v415 = vunpack.c.0.s8 %v414
        %v416 = vperm.slane %v412, %v415
        %v417 = vrot.slane %v404, 4
        %v418 = vsel %vm337, %v417, %v398
        %v419 = vrot.slane %v398, 4
        %v420 = vsel %vm337, %v404, %v419
        %v422 = vunpack.c.l.s4 1934713408
        %v423 = vunpack.c.0.s8 %v422
        %v424 = vperm.slane %v418, %v423
        %v426 = vunpack.c.l.s4 1934713408
        %v427 = vunpack.c.0.s8 %v426
        %v428 = vperm.slane %v420, %v427
        %v429 = vrot.slane %v416, 4
        %v430 = vsel %vm337, %v429, %v410
        %v431 = vrot.slane %v410, 4
        %v432 = vsel %vm337, %v416, %v431
        %v434 = vunpack.c.l.s4 1934713408
        %v435 = vunpack.c.0.s8 %v434
        %v436 = vperm.slane %v430, %v435
        %v438 = vunpack.c.l.s4 1934713408
        %v439 = vunpack.c.0.s8 %v438
        %v440 = vperm.slane %v432, %v439
        %v441 = vrot.slane %v436, 4
        %v442 = vsel %vm337, %v441, %v424
        %v443 = vrot.slane %v424, 4
        %v444 = vsel %vm337, %v436, %v443
        %v445 = vrot.slane %v440, 4
        %v446 = vsel %vm337, %v445, %v428
        %v447 = vrot.slane %v428, 4
        %v448 = vsel %vm337, %v440, %v447
        %457 = vrot.lane.b32.xlu0 %v386, 1
        %v458 = vpop.permute.xlu0 %457
        %459 = vrot.lane.b32.xlu0 %v442, 1
        %v460 = vpop.permute.xlu0 %459
        %461 = vrot.lane.b32.xlu0 %v388, 1
        %v462 = vpop.permute.xlu0 %461
        %463 = vrot.lane.b32.xlu0 %v444, 1
        %v464 = vpop.permute.xlu0 %463
        %465 = vrot.lane.b32.xlu0 %v390, 1
        %v466 = vpop.permute.xlu0 %465
        %467 = vrot.lane.b32.xlu0 %v446, 1
        %v468 = vpop.permute.xlu0 %467
        %469 = vrot.lane.b32.xlu0 %v392, 1
        %v470 = vpop.permute.xlu0 %469
        %471 = vrot.lane.b32.xlu0 %v448, 1
        %v472 = vpop.permute.xlu0 %471
        %vm481 = vcmask 138248
        %482 = vst.msk [vmem:[#allocation2 + $0x1] sm:$0xff] %vm481, %v458
        %483 = vst.msk [vmem:[#allocation2 + $0x9] sm:$0xff] %vm481, %v460
        %484 = vst.msk [vmem:[#allocation2 + $0x19] sm:$0xff] %vm481, %v462
        %485 = vst.msk [vmem:[#allocation2 + $0x21] sm:$0xff] %vm481, %v464
        %486 = vst.msk [vmem:[#allocation2 + $0x31] sm:$0xff] %vm481, %v466
        %487 = vst.msk [vmem:[#allocation2 + $0x39] sm:$0xff] %vm481, %v468
        %488 = vst.msk [vmem:[#allocation2 + $0x49] sm:$0xff] %vm481, %v470
        %489 = vst.msk [vmem:[#allocation2 + $0x51] sm:$0xff] %vm481, %v472
        %v490 = vld [vmem:[#allocation2] sm:$0xff]
        %v491 = vld [vmem:[#allocation2 + $0x8] sm:$0xff]
        %v492 = vld [vmem:[#allocation2 + $0x18] sm:$0xff]
        %v493 = vld [vmem:[#allocation2 + $0x20] sm:$0xff]
        %v494 = vld [vmem:[#allocation2 + $0x30] sm:$0xff]
        %v495 = vld [vmem:[#allocation2 + $0x38] sm:$0xff]
        %v496 = vld [vmem:[#allocation2 + $0x48] sm:$0xff]
        %v497 = vld [vmem:[#allocation2 + $0x50] sm:$0xff]
        %v498 = vrot.slane %v494, 4
        %v499 = vsel %vm337, %v498, %v490
        %v500 = vrot.slane %v490, 4
        %v501 = vsel %vm337, %v494, %v500
        %v503 = vunpack.c.l.s4 1983009808
        %v504 = vunpack.c.0.s8 %v503
        %v505 = vperm.slane %v499, %v504
        %v507 = vunpack.c.l.s4 1983009808
        %v508 = vunpack.c.0.s8 %v507
        %v509 = vperm.slane %v501, %v508
        %v510 = vrot.slane %v496, 4
        %v511 = vsel %vm337, %v510, %v492
        %v512 = vrot.slane %v492, 4
        %v513 = vsel %vm337, %v496, %v512
        %v515 = vunpack.c.l.s4 1983009808
        %v516 = vunpack.c.0.s8 %v515
        %v517 = vperm.slane %v511, %v516
        %v519 = vunpack.c.l.s4 1983009808
        %v520 = vunpack.c.0.s8 %v519
        %v521 = vperm.slane %v513, %v520
        %v522 = vrot.slane %v517, 4
        %v523 = vsel %vm337, %v522, %v505
        %v524 = vrot.slane %v505, 4
        %v525 = vsel %vm337, %v517, %v524
        %v527 = vunpack.c.l.s4 1934713408
        %v528 = vunpack.c.0.s8 %v527
        %v529 = vperm.slane %v523, %v528
        %v531 = vunpack.c.l.s4 1934713408
        %v532 = vunpack.c.0.s8 %v531
        %v533 = vperm.slane %v525, %v532
        %v534 = vrot.slane %v521, 4
        %v535 = vsel %vm337, %v534, %v509
        %v536 = vrot.slane %v509, 4
        %v537 = vsel %vm337, %v521, %v536
        %v539 = vunpack.c.l.s4 1934713408
        %v540 = vunpack.c.0.s8 %v539
        %v541 = vperm.slane %v535, %v540
        %v543 = vunpack.c.l.s4 1934713408
        %v544 = vunpack.c.0.s8 %v543
        %v545 = vperm.slane %v537, %v544
        %v546 = vrot.slane %v529, 4
        %v547 = vsel %vm337, 0.0, %v546
        %v548 = vrot.slane %v533, 4
        %v549 = vsel %vm337, 0.0, %v548
        %v550 = vrot.slane %v541, 4
        %v551 = vsel %vm337, 0.0, %v550
        %v552 = vrot.slane %v545, 4
        %v553 = vsel %vm337, 0.0, %v552
        %v554 = vrot.slane %v495, 4
        %v555 = vsel %vm337, %v554, %v491
        %v556 = vrot.slane %v491, 4
        %v557 = vsel %vm337, %v495, %v556
        %v559 = vunpack.c.l.s4 1983009808
        %v560 = vunpack.c.0.s8 %v559
        %v561 = vperm.slane %v555, %v560
        %v563 = vunpack.c.l.s4 1983009808
        %v564 = vunpack.c.0.s8 %v563
        %v565 = vperm.slane %v557, %v564
        %v566 = vrot.slane %v497, 4
        %v567 = vsel %vm337, %v566, %v493
        %v568 = vrot.slane %v493, 4
        %v569 = vsel %vm337, %v497, %v568
        %v571 = vunpack.c.l.s4 1983009808
        %v572 = vunpack.c.0.s8 %v571
        %v573 = vperm.slane %v567, %v572
        %v575 = vunpack.c.l.s4 1983009808
        %v576 = vunpack.c.0.s8 %v575
        %v577 = vperm.slane %v569, %v576
        %v578 = vrot.slane %v573, 4
        %v579 = vsel %vm337, %v578, %v561
        %v580 = vrot.slane %v561, 4
        %v581 = vsel %vm337, %v573, %v580
        %v583 = vunpack.c.l.s4 1934713408
        %v584 = vunpack.c.0.s8 %v583
        %v585 = vperm.slane %v579, %v584
        %v587 = vunpack.c.l.s4 1934713408
        %v588 = vunpack.c.0.s8 %v587
        %v589 = vperm.slane %v581, %v588
        %v590 = vrot.slane %v577, 4
        %v591 = vsel %vm337, %v590, %v565
        %v592 = vrot.slane %v565, 4
        %v593 = vsel %vm337, %v577, %v592
        %v595 = vunpack.c.l.s4 1934713408
        %v596 = vunpack.c.0.s8 %v595
        %v597 = vperm.slane %v591, %v596
        %v599 = vunpack.c.l.s4 1934713408
        %v600 = vunpack.c.0.s8 %v599
        %v601 = vperm.slane %v593, %v600
        %v602 = vrot.slane %v585, 4
        %v603 = vsel %vm337, 0.0, %v602
        %v604 = vrot.slane %v589, 4
        %v605 = vsel %vm337, 0.0, %v604
        %v606 = vrot.slane %v597, 4
        %v607 = vsel %vm337, 0.0, %v606
        %v608 = vrot.slane %v601, 4
        %v609 = vsel %vm337, 0.0, %v608
        %611 = vrot.lane.b32.xlu0 %v547, 16
        %v612 = vpop.permute.xlu0 %611
        %615 = vrot.lane.b32.xlu0 %v533, 32
        %v616 = vpop.permute.xlu0 %615
        %619 = vrot.lane.b32.xlu0 %v549, 48
        %v620 = vpop.permute.xlu0 %619
        %623 = vrot.lane.b32.xlu0 %v541, 64
        %v624 = vpop.permute.xlu0 %623
        %627 = vrot.lane.b32.xlu0 %v551, 80
        %v628 = vpop.permute.xlu0 %627
        %631 = vrot.lane.b32.xlu0 %v545, 96
        %v632 = vpop.permute.xlu0 %631
        %635 = vrot.lane.b32.xlu0 %v553, 112
        %v636 = vpop.permute.xlu0 %635
        %639 = vrot.lane.b32.xlu0 %v603, 16
        %v640 = vpop.permute.xlu0 %639
        %643 = vrot.lane.b32.xlu0 %v589, 32
        %v644 = vpop.permute.xlu0 %643
        %647 = vrot.lane.b32.xlu0 %v605, 48
        %v648 = vpop.permute.xlu0 %647
        %651 = vrot.lane.b32.xlu0 %v597, 64
        %v652 = vpop.permute.xlu0 %651
        %655 = vrot.lane.b32.xlu0 %v607, 80
        %v656 = vpop.permute.xlu0 %655
        %659 = vrot.lane.b32.xlu0 %v601, 96
        %v660 = vpop.permute.xlu0 %659
        %663 = vrot.lane.b32.xlu0 %v609, 112
        %v664 = vpop.permute.xlu0 %663
        %vm666 = vcmask 130048
        %v667 = vsel %vm666, %v529, %v612
        %vm668 = vcmask 261120
        %v669 = vsel %vm668, %v667, %v616
        %vm670 = vcmask 392192
        %v671 = vsel %vm670, %v669, %v620
        %vm672 = vcmask 523264
        %v673 = vsel %vm672, %v671, %v624
        %vm674 = vcmask 654336
        %v675 = vsel %vm674, %v673, %v628
        %vm676 = vcmask 785408
        %v677 = vsel %vm676, %v675, %v632
        %vm678 = vcmask 916480
        %v679 = vsel %vm678, %v677, %v636
        %v680 = vsel %vm666, %v585, %v640
        %v681 = vsel %vm668, %v680, %v644
        %v682 = vsel %vm670, %v681, %v648
        %v683 = vsel %vm672, %v682, %v652
        %v684 = vsel %vm674, %v683, %v656
        %v685 = vsel %vm676, %v684, %v660
        %v686 = vsel %vm678, %v685, %v664
        %v687 = vld [vmem:[%s3] sm:$0xff]
        %696 = vrot.lane.b32.xlu0 %v490, 127
        %v697 = vpop.permute.xlu0 %696
        %698 = vrot.lane.b32.xlu0 %v491, 127
        %v699 = vpop.permute.xlu0 %698
        %700 = vrot.lane.b32.xlu0 %v492, 127
        %v701 = vpop.permute.xlu0 %700
        %702 = vrot.lane.b32.xlu0 %v493, 127
        %v703 = vpop.permute.xlu0 %702
        %704 = vrot.lane.b32.xlu0 %v494, 127
        %v705 = vpop.permute.xlu0 %704
        %706 = vrot.lane.b32.xlu0 %v495, 127
        %v707 = vpop.permute.xlu0 %706
        %708 = vrot.lane.b32.xlu0 %v496, 127
        %v709 = vpop.permute.xlu0 %708
        %710 = vrot.lane.b32.xlu0 %v497, 127
        %v711 = vpop.permute.xlu0 %710
        %v720 = vrot.slane %v705, 4
        %v721 = vsel %vm337, %v720, %v697
        %v722 = vrot.slane %v697, 4
        %v723 = vsel %vm337, %v705, %v722
        %v725 = vunpack.c.l.s4 1983009808
        %v726 = vunpack.c.0.s8 %v725
        %v727 = vperm.slane %v721, %v726
        %v729 = vunpack.c.l.s4 1983009808
        %v730 = vunpack.c.0.s8 %v729
        %v731 = vperm.slane %v723, %v730
        %v732 = vrot.slane %v709, 4
        %v733 = vsel %vm337, %v732, %v701
        %v734 = vrot.slane %v701, 4
        %v735 = vsel %vm337, %v709, %v734
        %v737 = vunpack.c.l.s4 1983009808
        %v738 = vunpack.c.0.s8 %v737
        %v739 = vperm.slane %v733, %v738
        %v741 = vunpack.c.l.s4 1983009808
        %v742 = vunpack.c.0.s8 %v741
        %v743 = vperm.slane %v735, %v742
        %v744 = vrot.slane %v739, 4
        %v745 = vsel %vm337, %v744, %v727
        %v746 = vrot.slane %v727, 4
        %v747 = vsel %vm337, %v739, %v746
        %v749 = vunpack.c.l.s4 1934713408
        %v750 = vunpack.c.0.s8 %v749
        %v751 = vperm.slane %v745, %v750
        %v753 = vunpack.c.l.s4 1934713408
        %v754 = vunpack.c.0.s8 %v753
        %v755 = vperm.slane %v747, %v754
        %v756 = vrot.slane %v743, 4
        %v757 = vsel %vm337, %v756, %v731
        %v758 = vrot.slane %v731, 4
        %v759 = vsel %vm337, %v743, %v758
        %v761 = vunpack.c.l.s4 1934713408
        %v762 = vunpack.c.0.s8 %v761
        %v763 = vperm.slane %v757, %v762
        %v765 = vunpack.c.l.s4 1934713408
        %v766 = vunpack.c.0.s8 %v765
        %v767 = vperm.slane %v759, %v766
        %v768 = vrot.slane %v751, 4
        %v769 = vsel %vm337, 0.0, %v768
        %v770 = vrot.slane %v755, 4
        %v771 = vsel %vm337, 0.0, %v770
        %v772 = vrot.slane %v763, 4
        %v773 = vsel %vm337, 0.0, %v772
        %v774 = vrot.slane %v767, 4
        %v775 = vsel %vm337, 0.0, %v774
        %v776 = vrot.slane %v707, 4
        %v777 = vsel %vm337, %v776, %v699
        %v778 = vrot.slane %v699, 4
        %v779 = vsel %vm337, %v707, %v778
        %v781 = vunpack.c.l.s4 1983009808
        %v782 = vunpack.c.0.s8 %v781
        %v783 = vperm.slane %v777, %v782
        %v785 = vunpack.c.l.s4 1983009808
        %v786 = vunpack.c.0.s8 %v785
        %v787 = vperm.slane %v779, %v786
        %v788 = vrot.slane %v711, 4
        %v789 = vsel %vm337, %v788, %v703
        %v790 = vrot.slane %v703, 4
        %v791 = vsel %vm337, %v711, %v790
        %v793 = vunpack.c.l.s4 1983009808
        %v794 = vunpack.c.0.s8 %v793
        %v795 = vperm.slane %v789, %v794
        %v797 = vunpack.c.l.s4 1983009808
        %v798 = vunpack.c.0.s8 %v797
        %v799 = vperm.slane %v791, %v798
        %v800 = vrot.slane %v795, 4
        %v801 = vsel %vm337, %v800, %v783
        %v802 = vrot.slane %v783, 4
        %v803 = vsel %vm337, %v795, %v802
        %v805 = vunpack.c.l.s4 1934713408
        %v806 = vunpack.c.0.s8 %v805
        %v807 = vperm.slane %v801, %v806
        %v809 = vunpack.c.l.s4 1934713408
        %v810 = vunpack.c.0.s8 %v809
        %v811 = vperm.slane %v803, %v810
        %v812 = vrot.slane %v799, 4
        %v813 = vsel %vm337, %v812, %v787
        %v814 = vrot.slane %v787, 4
        %v815 = vsel %vm337, %v799, %v814
        %v817 = vunpack.c.l.s4 1934713408
        %v818 = vunpack.c.0.s8 %v817
        %v819 = vperm.slane %v813, %v818
        %v821 = vunpack.c.l.s4 1934713408
        %v822 = vunpack.c.0.s8 %v821
        %v823 = vperm.slane %v815, %v822
        %v824 = vrot.slane %v807, 4
        %v825 = vsel %vm337, 0.0, %v824
        %v826 = vrot.slane %v811, 4
        %v827 = vsel %vm337, 0.0, %v826
        %v828 = vrot.slane %v819, 4
        %v829 = vsel %vm337, 0.0, %v828
        %v830 = vrot.slane %v823, 4
        %v831 = vsel %vm337, 0.0, %v830
        %833 = vrot.lane.b32.xlu0 %v769, 16
        %v834 = vpop.permute.xlu0 %833
        %837 = vrot.lane.b32.xlu0 %v755, 32
        %v838 = vpop.permute.xlu0 %837
        %841 = vrot.lane.b32.xlu0 %v771, 48
        %v842 = vpop.permute.xlu0 %841
        %845 = vrot.lane.b32.xlu0 %v763, 64
        %v846 = vpop.permute.xlu0 %845
        %849 = vrot.lane.b32.xlu0 %v773, 80
        %v850 = vpop.permute.xlu0 %849
        %853 = vrot.lane.b32.xlu0 %v767, 96
        %v854 = vpop.permute.xlu0 %853
        %857 = vrot.lane.b32.xlu0 %v775, 112
        %v858 = vpop.permute.xlu0 %857
        %861 = vrot.lane.b32.xlu0 %v825, 16
        %v862 = vpop.permute.xlu0 %861
        %865 = vrot.lane.b32.xlu0 %v811, 32
        %v866 = vpop.permute.xlu0 %865
        %869 = vrot.lane.b32.xlu0 %v827, 48
        %v870 = vpop.permute.xlu0 %869
        %873 = vrot.lane.b32.xlu0 %v819, 64
        %v874 = vpop.permute.xlu0 %873
        %877 = vrot.lane.b32.xlu0 %v829, 80
        %v878 = vpop.permute.xlu0 %877
        %881 = vrot.lane.b32.xlu0 %v823, 96
        %v882 = vpop.permute.xlu0 %881
        %885 = vrot.lane.b32.xlu0 %v831, 112
        %v886 = vpop.permute.xlu0 %885
        %v888 = vsel %vm666, %v751, %v834
        %v889 = vsel %vm668, %v888, %v838
        %v890 = vsel %vm670, %v889, %v842
        %v891 = vsel %vm672, %v890, %v846
        %v892 = vsel %vm674, %v891, %v850
        %v893 = vsel %vm676, %v892, %v854
        %v894 = vsel %vm678, %v893, %v858
        %v895 = vsel %vm666, %v807, %v862
        %v896 = vsel %vm668, %v895, %v866
        %v897 = vsel %vm670, %v896, %v870
        %v898 = vsel %vm672, %v897, %v874
        %v899 = vsel %vm674, %v898, %v878
        %v900 = vsel %vm676, %v899, %v882
        %v901 = vsel %vm678, %v900, %v886
        %s902 = scalar_lea.vmem %s3, 8
        %v903 = vld [vmem:[%s902] sm:$0xff]
        %vm904 = vcmask 31744
        %v906 = vsel %vm904, %v903, 0
        %vm908 = vcmask 1043456
        %v910 = vsel %vm908, %v894, 0
        %v913 = vsel %vm908, %v901, 0
        %915 = vmatpush.msra.mxu0 0.0
        %916 = vmatpush.msra.mxu0 0.0
        %917 = vmatpush.msra.mxu0 0.0
        %918 = vmatpush.msra.mxu0 0.0
        %919 = vmatpush.msra.mxu0 0.0
        %920 = vmatpush.msra.mxu0 0.0
        %921 = vmatpush.msra.mxu0 0.0
        %922 = vmatpush.msra.mxu0 0.0
        %923 = vmatpush.msra.mxu0 0.0
        %924 = vmatpush.msra.mxu0 0.0
        %925 = vmatpush.msra.mxu0 0.0
        %926 = vmatpush.msra.mxu0 0.0
        %927 = vmatpush.msra.mxu0 0.0
        %928 = vmatpush.msra.mxu0 0.0
        %929 = vmatpush.msra.mxu0 0.0
        %930 = vmatpush.msra.mxu0 %v910
        %931 = vmatmul.f32.gmra.mxu0 %v906
        %v932 = vpop.f32.mrf.mxu0
        %v933 = vadd.f32 0.0, %v932
        %934 = vdwg.mxu0
        %935 = vmatpush.msra.mxu0 0.0
        %936 = vmatpush.msra.mxu0 0.0
        %937 = vmatpush.msra.mxu0 0.0
        %938 = vmatpush.msra.mxu0 0.0
        %939 = vmatpush.msra.mxu0 0.0
        %940 = vmatpush.msra.mxu0 0.0
        %941 = vmatpush.msra.mxu0 0.0
        %942 = vmatpush.msra.mxu0 0.0
        %943 = vmatpush.msra.mxu0 0.0
        %944 = vmatpush.msra.mxu0 0.0
        %945 = vmatpush.msra.mxu0 0.0
        %946 = vmatpush.msra.mxu0 0.0
        %947 = vmatpush.msra.mxu0 0.0
        %948 = vmatpush.msra.mxu0 0.0
        %949 = vmatpush.msra.mxu0 0.0
        %950 = vmatpush.msra.mxu0 %v913
        %951 = vmatmul.f32.gmra.mxu0 %v906
        %v952 = vpop.f32.mrf.mxu0
        %v953 = vadd.f32 0.0, %v952
        %954 = vdwg.mxu0
        %v956 = vsel %vm904, %v687, 0
        %v959 = vsel %vm908, %v679, 0
        %v962 = vsel %vm908, %v686, 0
        %964 = vmatpush.msra.mxu0 0.0
        %965 = vmatpush.msra.mxu0 0.0
        %966 = vmatpush.msra.mxu0 0.0
        %967 = vmatpush.msra.mxu0 0.0
        %968 = vmatpush.msra.mxu0 0.0
        %969 = vmatpush.msra.mxu0 0.0
        %970 = vmatpush.msra.mxu0 0.0
        %971 = vmatpush.msra.mxu0 0.0
        %972 = vmatpush.msra.mxu0 0.0
        %973 = vmatpush.msra.mxu0 0.0
        %974 = vmatpush.msra.mxu0 0.0
        %975 = vmatpush.msra.mxu0 0.0
        %976 = vmatpush.msra.mxu0 0.0
        %977 = vmatpush.msra.mxu0 0.0
        %978 = vmatpush.msra.mxu0 0.0
        %979 = vmatpush.msra.mxu0 %v959
        %980 = vmatmul.f32.gmra.mxu0 %v956
        %v981 = vpop.f32.mrf.mxu0
        %v982 = vadd.f32 %v933, %v981
        %983 = vdwg.mxu0
        %984 = vmatpush.msra.mxu0 0.0
        %985 = vmatpush.msra.mxu0 0.0
        %986 = vmatpush.msra.mxu0 0.0
        %987 = vmatpush.msra.mxu0 0.0
        %988 = vmatpush.msra.mxu0 0.0
        %989 = vmatpush.msra.mxu0 0.0
        %990 = vmatpush.msra.mxu0 0.0
        %991 = vmatpush.msra.mxu0 0.0
        %992 = vmatpush.msra.mxu0 0.0
        %993 = vmatpush.msra.mxu0 0.0
        %994 = vmatpush.msra.mxu0 0.0
        %995 = vmatpush.msra.mxu0 0.0
        %996 = vmatpush.msra.mxu0 0.0
        %997 = vmatpush.msra.mxu0 0.0
        %998 = vmatpush.msra.mxu0 0.0
        %999 = vmatpush.msra.mxu0 %v962
        %1000 = vmatmul.f32.gmra.mxu0 %v956
        %v1001 = vpop.f32.mrf.mxu0
        %v1002 = vadd.f32 %v953, %v1001
        %1003 = vdwg.mxu0
        %v1004 = vld [vmem:[#allocation2] sm:$0xff]
        %v1005 = vld [vmem:[#allocation2 + $0x8] sm:$0xff]
        %v1006 = vld [vmem:[#allocation2 + $0x18] sm:$0xff]
        %v1007 = vld [vmem:[#allocation2 + $0x20] sm:$0xff]
        %v1008 = vld [vmem:[#allocation2 + $0x30] sm:$0xff]
        %v1009 = vld [vmem:[#allocation2 + $0x38] sm:$0xff]
        %v1010 = vld [vmem:[#allocation2 + $0x48] sm:$0xff]
        %v1011 = vld [vmem:[#allocation2 + $0x50] sm:$0xff]
        %1020 = vrot.lane.b32.xlu0 %v1004, 126
        %v1021 = vpop.permute.xlu0 %1020
        %1022 = vrot.lane.b32.xlu0 %v1005, 126
        %v1023 = vpop.permute.xlu0 %1022
        %1024 = vrot.lane.b32.xlu0 %v1006, 126
        %v1025 = vpop.permute.xlu0 %1024
        %1026 = vrot.lane.b32.xlu0 %v1007, 126
        %v1027 = vpop.permute.xlu0 %1026
        %1028 = vrot.lane.b32.xlu0 %v1008, 126
        %v1029 = vpop.permute.xlu0 %1028
        %1030 = vrot.lane.b32.xlu0 %v1009, 126
        %v1031 = vpop.permute.xlu0 %1030
        %1032 = vrot.lane.b32.xlu0 %v1010, 126
        %v1033 = vpop.permute.xlu0 %1032
        %1034 = vrot.lane.b32.xlu0 %v1011, 126
        %v1035 = vpop.permute.xlu0 %1034
        %v1044 = vrot.slane %v1029, 4
        %v1045 = vsel %vm337, %v1044, %v1021
        %v1046 = vrot.slane %v1021, 4
        %v1047 = vsel %vm337, %v1029, %v1046
        %v1049 = vunpack.c.l.s4 1983009808
        %v1050 = vunpack.c.0.s8 %v1049
        %v1051 = vperm.slane %v1045, %v1050
        %v1053 = vunpack.c.l.s4 1983009808
        %v1054 = vunpack.c.0.s8 %v1053
        %v1055 = vperm.slane %v1047, %v1054
        %v1056 = vrot.slane %v1033, 4
        %v1057 = vsel %vm337, %v1056, %v1025
        %v1058 = vrot.slane %v1025, 4
        %v1059 = vsel %vm337, %v1033, %v1058
        %v1061 = vunpack.c.l.s4 1983009808
        %v1062 = vunpack.c.0.s8 %v1061
        %v1063 = vperm.slane %v1057, %v1062
        %v1065 = vunpack.c.l.s4 1983009808
        %v1066 = vunpack.c.0.s8 %v1065
        %v1067 = vperm.slane %v1059, %v1066
        %v1068 = vrot.slane %v1063, 4
        %v1069 = vsel %vm337, %v1068, %v1051
        %v1070 = vrot.slane %v1051, 4
        %v1071 = vsel %vm337, %v1063, %v1070
        %v1073 = vunpack.c.l.s4 1934713408
        %v1074 = vunpack.c.0.s8 %v1073
        %v1075 = vperm.slane %v1069, %v1074
        %v1077 = vunpack.c.l.s4 1934713408
        %v1078 = vunpack.c.0.s8 %v1077
        %v1079 = vperm.slane %v1071, %v1078
        %v1080 = vrot.slane %v1067, 4
        %v1081 = vsel %vm337, %v1080, %v1055
        %v1082 = vrot.slane %v1055, 4
        %v1083 = vsel %vm337, %v1067, %v1082
        %v1085 = vunpack.c.l.s4 1934713408
        %v1086 = vunpack.c.0.s8 %v1085
        %v1087 = vperm.slane %v1081, %v1086
        %v1089 = vunpack.c.l.s4 1934713408
        %v1090 = vunpack.c.0.s8 %v1089
        %v1091 = vperm.slane %v1083, %v1090
        %v1092 = vrot.slane %v1075, 4
        %v1093 = vsel %vm337, 0.0, %v1092
        %v1094 = vrot.slane %v1079, 4
        %v1095 = vsel %vm337, 0.0, %v1094
        %v1096 = vrot.slane %v1087, 4
        %v1097 = vsel %vm337, 0.0, %v1096
        %v1098 = vrot.slane %v1091, 4
        %v1099 = vsel %vm337, 0.0, %v1098
        %v1100 = vrot.slane %v1031, 4
        %v1101 = vsel %vm337, %v1100, %v1023
        %v1102 = vrot.slane %v1023, 4
        %v1103 = vsel %vm337, %v1031, %v1102
        %v1105 = vunpack.c.l.s4 1983009808
        %v1106 = vunpack.c.0.s8 %v1105
        %v1107 = vperm.slane %v1101, %v1106
        %v1109 = vunpack.c.l.s4 1983009808
        %v1110 = vunpack.c.0.s8 %v1109
        %v1111 = vperm.slane %v1103, %v1110
        %v1112 = vrot.slane %v1035, 4
        %v1113 = vsel %vm337, %v1112, %v1027
        %v1114 = vrot.slane %v1027, 4
        %v1115 = vsel %vm337, %v1035, %v1114
        %v1117 = vunpack.c.l.s4 1983009808
        %v1118 = vunpack.c.0.s8 %v1117
        %v1119 = vperm.slane %v1113, %v1118
        %v1121 = vunpack.c.l.s4 1983009808
        %v1122 = vunpack.c.0.s8 %v1121
        %v1123 = vperm.slane %v1115, %v1122
        %v1124 = vrot.slane %v1119, 4
        %v1125 = vsel %vm337, %v1124, %v1107
        %v1126 = vrot.slane %v1107, 4
        %v1127 = vsel %vm337, %v1119, %v1126
        %v1129 = vunpack.c.l.s4 1934713408
        %v1130 = vunpack.c.0.s8 %v1129
        %v1131 = vperm.slane %v1125, %v1130
        %v1133 = vunpack.c.l.s4 1934713408
        %v1134 = vunpack.c.0.s8 %v1133
        %v1135 = vperm.slane %v1127, %v1134
        %v1136 = vrot.slane %v1123, 4
        %v1137 = vsel %vm337, %v1136, %v1111
        %v1138 = vrot.slane %v1111, 4
        %v1139 = vsel %vm337, %v1123, %v1138
        %v1141 = vunpack.c.l.s4 1934713408
        %v1142 = vunpack.c.0.s8 %v1141
        %v1143 = vperm.slane %v1137, %v1142
        %v1145 = vunpack.c.l.s4 1934713408
        %v1146 = vunpack.c.0.s8 %v1145
        %v1147 = vperm.slane %v1139, %v1146
        %v1148 = vrot.slane %v1131, 4
        %v1149 = vsel %vm337, 0.0, %v1148
        %v1150 = vrot.slane %v1135, 4
        %v1151 = vsel %vm337, 0.0, %v1150
        %v1152 = vrot.slane %v1143, 4
        %v1153 = vsel %vm337, 0.0, %v1152
        %v1154 = vrot.slane %v1147, 4
        %v1155 = vsel %vm337, 0.0, %v1154
        %1157 = vrot.lane.b32.xlu0 %v1093, 16
        %v1158 = vpop.permute.xlu0 %1157
        %1161 = vrot.lane.b32.xlu0 %v1079, 32
        %v1162 = vpop.permute.xlu0 %1161
        %1165 = vrot.lane.b32.xlu0 %v1095, 48
        %v1166 = vpop.permute.xlu0 %1165
        %1169 = vrot.lane.b32.xlu0 %v1087, 64
        %v1170 = vpop.permute.xlu0 %1169
        %1173 = vrot.lane.b32.xlu0 %v1097, 80
        %v1174 = vpop.permute.xlu0 %1173
        %1177 = vrot.lane.b32.xlu0 %v1091, 96
        %v1178 = vpop.permute.xlu0 %1177
        %1181 = vrot.lane.b32.xlu0 %v1099, 112
        %v1182 = vpop.permute.xlu0 %1181
        %1185 = vrot.lane.b32.xlu0 %v1149, 16
        %v1186 = vpop.permute.xlu0 %1185
        %1189 = vrot.lane.b32.xlu0 %v1135, 32
        %v1190 = vpop.permute.xlu0 %1189
        %1193 = vrot.lane.b32.xlu0 %v1151, 48
        %v1194 = vpop.permute.xlu0 %1193
        %1197 = vrot.lane.b32.xlu0 %v1143, 64
        %v1198 = vpop.permute.xlu0 %1197
        %1201 = vrot.lane.b32.xlu0 %v1153, 80
        %v1202 = vpop.permute.xlu0 %1201
        %1205 = vrot.lane.b32.xlu0 %v1147, 96
        %v1206 = vpop.permute.xlu0 %1205
        %1209 = vrot.lane.b32.xlu0 %v1155, 112
        %v1210 = vpop.permute.xlu0 %1209
        %v1212 = vsel %vm666, %v1075, %v1158
        %v1213 = vsel %vm668, %v1212, %v1162
        %v1214 = vsel %vm670, %v1213, %v1166
        %v1215 = vsel %vm672, %v1214, %v1170
        %v1216 = vsel %vm674, %v1215, %v1174
        %v1217 = vsel %vm676, %v1216, %v1178
        %v1218 = vsel %vm678, %v1217, %v1182
        %v1219 = vsel %vm666, %v1131, %v1186
        %v1220 = vsel %vm668, %v1219, %v1190
        %v1221 = vsel %vm670, %v1220, %v1194
        %v1222 = vsel %vm672, %v1221, %v1198
        %v1223 = vsel %vm674, %v1222, %v1202
        %v1224 = vsel %vm676, %v1223, %v1206
        %v1225 = vsel %vm678, %v1224, %v1210
        %s1226 = scalar_lea.vmem %s3, 16
        %v1227 = vld [vmem:[%s1226] sm:$0xff]
        %v1229 = vsel %vm904, %v1227, 0
        %v1232 = vsel %vm908, %v1218, 0
        %v1235 = vsel %vm908, %v1225, 0
        %1237 = vmatpush.msra.mxu0 0.0
        %1238 = vmatpush.msra.mxu0 0.0
        %1239 = vmatpush.msra.mxu0 0.0
        %1240 = vmatpush.msra.mxu0 0.0
        %1241 = vmatpush.msra.mxu0 0.0
        %1242 = vmatpush.msra.mxu0 0.0
        %1243 = vmatpush.msra.mxu0 0.0
        %1244 = vmatpush.msra.mxu0 0.0
        %1245 = vmatpush.msra.mxu0 0.0
        %1246 = vmatpush.msra.mxu0 0.0
        %1247 = vmatpush.msra.mxu0 0.0
        %1248 = vmatpush.msra.mxu0 0.0
        %1249 = vmatpush.msra.mxu0 0.0
        %1250 = vmatpush.msra.mxu0 0.0
        %1251 = vmatpush.msra.mxu0 0.0
        %1252 = vmatpush.msra.mxu0 %v1232
        %1253 = vmatmul.f32.gmra.mxu0 %v1229
        %v1254 = vpop.f32.mrf.mxu0
        %v1255 = vadd.f32 0.0, %v1254
        %1256 = vdwg.mxu0
        %1257 = vmatpush.msra.mxu0 0.0
        %1258 = vmatpush.msra.mxu0 0.0
        %1259 = vmatpush.msra.mxu0 0.0
        %1260 = vmatpush.msra.mxu0 0.0
        %1261 = vmatpush.msra.mxu0 0.0
        %1262 = vmatpush.msra.mxu0 0.0
        %1263 = vmatpush.msra.mxu0 0.0
        %1264 = vmatpush.msra.mxu0 0.0
        %1265 = vmatpush.msra.mxu0 0.0
        %1266 = vmatpush.msra.mxu0 0.0
        %1267 = vmatpush.msra.mxu0 0.0
        %1268 = vmatpush.msra.mxu0 0.0
        %1269 = vmatpush.msra.mxu0 0.0
        %1270 = vmatpush.msra.mxu0 0.0
        %1271 = vmatpush.msra.mxu0 0.0
        %1272 = vmatpush.msra.mxu0 %v1235
        %1273 = vmatmul.f32.gmra.mxu0 %v1229
        %v1274 = vpop.f32.mrf.mxu0
        %v1275 = vadd.f32 0.0, %v1274
        %1276 = vdwg.mxu0
        %v1277 = vadd.f32 %v982, %v1255
        %v1278 = vadd.f32 %v1002, %v1275
        %v1279 = vld [vmem:[#allocation2 + $0x1] sm:$0xff]
        %v1280 = vld [vmem:[#allocation2 + $0x9] sm:$0xff]
        %v1281 = vld [vmem:[#allocation2 + $0x19] sm:$0xff]
        %v1282 = vld [vmem:[#allocation2 + $0x21] sm:$0xff]
        %v1283 = vld [vmem:[#allocation2 + $0x31] sm:$0xff]
        %v1284 = vld [vmem:[#allocation2 + $0x39] sm:$0xff]
        %v1285 = vld [vmem:[#allocation2 + $0x49] sm:$0xff]
        %v1286 = vld [vmem:[#allocation2 + $0x51] sm:$0xff]
        %v1287 = vrot.slane %v1283, 4
        %v1288 = vsel %vm337, %v1287, %v1279
        %v1289 = vrot.slane %v1279, 4
        %v1290 = vsel %vm337, %v1283, %v1289
        %v1292 = vunpack.c.l.s4 1983009808
        %v1293 = vunpack.c.0.s8 %v1292
        %v1294 = vperm.slane %v1288, %v1293
        %v1296 = vunpack.c.l.s4 1983009808
        %v1297 = vunpack.c.0.s8 %v1296
        %v1298 = vperm.slane %v1290, %v1297
        %v1299 = vrot.slane %v1285, 4
        %v1300 = vsel %vm337, %v1299, %v1281
        %v1301 = vrot.slane %v1281, 4
        %v1302 = vsel %vm337, %v1285, %v1301
        %v1304 = vunpack.c.l.s4 1983009808
        %v1305 = vunpack.c.0.s8 %v1304
        %v1306 = vperm.slane %v1300, %v1305
        %v1308 = vunpack.c.l.s4 1983009808
        %v1309 = vunpack.c.0.s8 %v1308
        %v1310 = vperm.slane %v1302, %v1309
        %v1311 = vrot.slane %v1306, 4
        %v1312 = vsel %vm337, %v1311, %v1294
        %v1313 = vrot.slane %v1294, 4
        %v1314 = vsel %vm337, %v1306, %v1313
        %v1316 = vunpack.c.l.s4 1934713408
        %v1317 = vunpack.c.0.s8 %v1316
        %v1318 = vperm.slane %v1312, %v1317
        %v1320 = vunpack.c.l.s4 1934713408
        %v1321 = vunpack.c.0.s8 %v1320
        %v1322 = vperm.slane %v1314, %v1321
        %v1323 = vrot.slane %v1310, 4
        %v1324 = vsel %vm337, %v1323, %v1298
        %v1325 = vrot.slane %v1298, 4
        %v1326 = vsel %vm337, %v1310, %v1325
        %v1328 = vunpack.c.l.s4 1934713408
        %v1329 = vunpack.c.0.s8 %v1328
        %v1330 = vperm.slane %v1324, %v1329
        %v1332 = vunpack.c.l.s4 1934713408
        %v1333 = vunpack.c.0.s8 %v1332
        %v1334 = vperm.slane %v1326, %v1333
        %v1335 = vrot.slane %v1318, 4
        %v1336 = vsel %vm337, 0.0, %v1335
        %v1337 = vrot.slane %v1322, 4
        %v1338 = vsel %vm337, 0.0, %v1337
        %v1339 = vrot.slane %v1330, 4
        %v1340 = vsel %vm337, 0.0, %v1339
        %v1341 = vrot.slane %v1334, 4
        %v1342 = vsel %vm337, 0.0, %v1341
        %v1343 = vrot.slane %v1284, 4
        %v1344 = vsel %vm337, %v1343, %v1280
        %v1345 = vrot.slane %v1280, 4
        %v1346 = vsel %vm337, %v1284, %v1345
        %v1348 = vunpack.c.l.s4 1983009808
        %v1349 = vunpack.c.0.s8 %v1348
        %v1350 = vperm.slane %v1344, %v1349
        %v1352 = vunpack.c.l.s4 1983009808
        %v1353 = vunpack.c.0.s8 %v1352
        %v1354 = vperm.slane %v1346, %v1353
        %v1355 = vrot.slane %v1286, 4
        %v1356 = vsel %vm337, %v1355, %v1282
        %v1357 = vrot.slane %v1282, 4
        %v1358 = vsel %vm337, %v1286, %v1357
        %v1360 = vunpack.c.l.s4 1983009808
        %v1361 = vunpack.c.0.s8 %v1360
        %v1362 = vperm.slane %v1356, %v1361
        %v1364 = vunpack.c.l.s4 1983009808
        %v1365 = vunpack.c.0.s8 %v1364
        %v1366 = vperm.slane %v1358, %v1365
        %v1367 = vrot.slane %v1362, 4
        %v1368 = vsel %vm337, %v1367, %v1350
        %v1369 = vrot.slane %v1350, 4
        %v1370 = vsel %vm337, %v1362, %v1369
        %v1372 = vunpack.c.l.s4 1934713408
        %v1373 = vunpack.c.0.s8 %v1372
        %v1374 = vperm.slane %v1368, %v1373
        %v1376 = vunpack.c.l.s4 1934713408
        %v1377 = vunpack.c.0.s8 %v1376
        %v1378 = vperm.slane %v1370, %v1377
        %v1379 = vrot.slane %v1366, 4
        %v1380 = vsel %vm337, %v1379, %v1354
        %v1381 = vrot.slane %v1354, 4
        %v1382 = vsel %vm337, %v1366, %v1381
        %v1384 = vunpack.c.l.s4 1934713408
        %v1385 = vunpack.c.0.s8 %v1384
        %v1386 = vperm.slane %v1380, %v1385
        %v1388 = vunpack.c.l.s4 1934713408
        %v1389 = vunpack.c.0.s8 %v1388
        %v1390 = vperm.slane %v1382, %v1389
        %v1391 = vrot.slane %v1374, 4
        %v1392 = vsel %vm337, 0.0, %v1391
        %v1393 = vrot.slane %v1378, 4
        %v1394 = vsel %vm337, 0.0, %v1393
        %v1395 = vrot.slane %v1386, 4
        %v1396 = vsel %vm337, 0.0, %v1395
        %v1397 = vrot.slane %v1390, 4
        %v1398 = vsel %vm337, 0.0, %v1397
        %1400 = vrot.lane.b32.xlu0 %v1336, 16
        %v1401 = vpop.permute.xlu0 %1400
        %1404 = vrot.lane.b32.xlu0 %v1322, 32
        %v1405 = vpop.permute.xlu0 %1404
        %1408 = vrot.lane.b32.xlu0 %v1338, 48
        %v1409 = vpop.permute.xlu0 %1408
        %1412 = vrot.lane.b32.xlu0 %v1330, 64
        %v1413 = vpop.permute.xlu0 %1412
        %1416 = vrot.lane.b32.xlu0 %v1340, 80
        %v1417 = vpop.permute.xlu0 %1416
        %1420 = vrot.lane.b32.xlu0 %v1334, 96
        %v1421 = vpop.permute.xlu0 %1420
        %1424 = vrot.lane.b32.xlu0 %v1342, 112
        %v1425 = vpop.permute.xlu0 %1424
        %1428 = vrot.lane.b32.xlu0 %v1392, 16
        %v1429 = vpop.permute.xlu0 %1428
        %1432 = vrot.lane.b32.xlu0 %v1378, 32
        %v1433 = vpop.permute.xlu0 %1432
        %1436 = vrot.lane.b32.xlu0 %v1394, 48
        %v1437 = vpop.permute.xlu0 %1436
        %1440 = vrot.lane.b32.xlu0 %v1386, 64
        %v1441 = vpop.permute.xlu0 %1440
        %1444 = vrot.lane.b32.xlu0 %v1396, 80
        %v1445 = vpop.permute.xlu0 %1444
        %1448 = vrot.lane.b32.xlu0 %v1390, 96
        %v1449 = vpop.permute.xlu0 %1448
        %1452 = vrot.lane.b32.xlu0 %v1398, 112
        %v1453 = vpop.permute.xlu0 %1452
        %v1455 = vsel %vm666, %v1318, %v1401
        %v1456 = vsel %vm668, %v1455, %v1405
        %v1457 = vsel %vm670, %v1456, %v1409
        %v1458 = vsel %vm672, %v1457, %v1413
        %v1459 = vsel %vm674, %v1458, %v1417
        %v1460 = vsel %vm676, %v1459, %v1421
        %v1461 = vsel %vm678, %v1460, %v1425
        %v1462 = vsel %vm666, %v1374, %v1429
        %v1463 = vsel %vm668, %v1462, %v1433
        %v1464 = vsel %vm670, %v1463, %v1437
        %v1465 = vsel %vm672, %v1464, %v1441
        %v1466 = vsel %vm674, %v1465, %v1445
        %v1467 = vsel %vm676, %v1466, %v1449
        %v1468 = vsel %vm678, %v1467, %v1453
        %s1469 = scalar_lea.vmem %s3, 24
        %v1470 = vld [vmem:[%s1469] sm:$0xff]
        %v1472 = vsel %vm904, %v1470, 0
        %v1475 = vsel %vm908, %v1461, 0
        %v1478 = vsel %vm908, %v1468, 0
        %1480 = vmatpush.msra.mxu0 0.0
        %1481 = vmatpush.msra.mxu0 0.0
        %1482 = vmatpush.msra.mxu0 0.0
        %1483 = vmatpush.msra.mxu0 0.0
        %1484 = vmatpush.msra.mxu0 0.0
        %1485 = vmatpush.msra.mxu0 0.0
        %1486 = vmatpush.msra.mxu0 0.0
        %1487 = vmatpush.msra.mxu0 0.0
        %1488 = vmatpush.msra.mxu0 0.0
        %1489 = vmatpush.msra.mxu0 0.0
        %1490 = vmatpush.msra.mxu0 0.0
        %1491 = vmatpush.msra.mxu0 0.0
        %1492 = vmatpush.msra.mxu0 0.0
        %1493 = vmatpush.msra.mxu0 0.0
        %1494 = vmatpush.msra.mxu0 0.0
        %1495 = vmatpush.msra.mxu0 %v1475
        %1496 = vmatmul.f32.gmra.mxu0 %v1472
        %v1497 = vpop.f32.mrf.mxu0
        %v1498 = vadd.f32 0.0, %v1497
        %1499 = vdwg.mxu0
        %1500 = vmatpush.msra.mxu0 0.0
        %1501 = vmatpush.msra.mxu0 0.0
        %1502 = vmatpush.msra.mxu0 0.0
        %1503 = vmatpush.msra.mxu0 0.0
        %1504 = vmatpush.msra.mxu0 0.0
        %1505 = vmatpush.msra.mxu0 0.0
        %1506 = vmatpush.msra.mxu0 0.0
        %1507 = vmatpush.msra.mxu0 0.0
        %1508 = vmatpush.msra.mxu0 0.0
        %1509 = vmatpush.msra.mxu0 0.0
        %1510 = vmatpush.msra.mxu0 0.0
        %1511 = vmatpush.msra.mxu0 0.0
        %1512 = vmatpush.msra.mxu0 0.0
        %1513 = vmatpush.msra.mxu0 0.0
        %1514 = vmatpush.msra.mxu0 0.0
        %1515 = vmatpush.msra.mxu0 %v1478
        %1516 = vmatmul.f32.gmra.mxu0 %v1472
        %v1517 = vpop.f32.mrf.mxu0
        %v1518 = vadd.f32 0.0, %v1517
        %1519 = vdwg.mxu0
        %v1520 = vadd.f32 %v1277, %v1498
        %v1521 = vadd.f32 %v1278, %v1518
        %v1522 = vld [vmem:[#allocation2 + $0x1] sm:$0xff]
        %v1523 = vld [vmem:[#allocation2 + $0x9] sm:$0xff]
        %v1524 = vld [vmem:[#allocation2 + $0x19] sm:$0xff]
        %v1525 = vld [vmem:[#allocation2 + $0x21] sm:$0xff]
        %v1526 = vld [vmem:[#allocation2 + $0x31] sm:$0xff]
        %v1527 = vld [vmem:[#allocation2 + $0x39] sm:$0xff]
        %v1528 = vld [vmem:[#allocation2 + $0x49] sm:$0xff]
        %v1529 = vld [vmem:[#allocation2 + $0x51] sm:$0xff]
        %1538 = vrot.lane.b32.xlu0 %v1522, 127
        %v1539 = vpop.permute.xlu0 %1538
        %1540 = vrot.lane.b32.xlu0 %v1523, 127
        %v1541 = vpop.permute.xlu0 %1540
        %1542 = vrot.lane.b32.xlu0 %v1524, 127
        %v1543 = vpop.permute.xlu0 %1542
        %1544 = vrot.lane.b32.xlu0 %v1525, 127
        %v1545 = vpop.permute.xlu0 %1544
        %1546 = vrot.lane.b32.xlu0 %v1526, 127
        %v1547 = vpop.permute.xlu0 %1546
        %1548 = vrot.lane.b32.xlu0 %v1527, 127
        %v1549 = vpop.permute.xlu0 %1548
        %1550 = vrot.lane.b32.xlu0 %v1528, 127
        %v1551 = vpop.permute.xlu0 %1550
        %1552 = vrot.lane.b32.xlu0 %v1529, 127
        %v1553 = vpop.permute.xlu0 %1552
        %v1562 = vrot.slane %v1547, 4
        %v1563 = vsel %vm337, %v1562, %v1539
        %v1564 = vrot.slane %v1539, 4
        %v1565 = vsel %vm337, %v1547, %v1564
        %v1567 = vunpack.c.l.s4 1983009808
        %v1568 = vunpack.c.0.s8 %v1567
        %v1569 = vperm.slane %v1563, %v1568
        %v1571 = vunpack.c.l.s4 1983009808
        %v1572 = vunpack.c.0.s8 %v1571
        %v1573 = vperm.slane %v1565, %v1572
        %v1574 = vrot.slane %v1551, 4
        %v1575 = vsel %vm337, %v1574, %v1543
        %v1576 = vrot.slane %v1543, 4
        %v1577 = vsel %vm337, %v1551, %v1576
        %v1579 = vunpack.c.l.s4 1983009808
        %v1580 = vunpack.c.0.s8 %v1579
        %v1581 = vperm.slane %v1575, %v1580
        %v1583 = vunpack.c.l.s4 1983009808
        %v1584 = vunpack.c.0.s8 %v1583
        %v1585 = vperm.slane %v1577, %v1584
        %v1586 = vrot.slane %v1581, 4
        %v1587 = vsel %vm337, %v1586, %v1569
        %v1588 = vrot.slane %v1569, 4
        %v1589 = vsel %vm337, %v1581, %v1588
        %v1591 = vunpack.c.l.s4 1934713408
        %v1592 = vunpack.c.0.s8 %v1591
        %v1593 = vperm.slane %v1587, %v1592
        %v1595 = vunpack.c.l.s4 1934713408
        %v1596 = vunpack.c.0.s8 %v1595
        %v1597 = vperm.slane %v1589, %v1596
        %v1598 = vrot.slane %v1585, 4
        %v1599 = vsel %vm337, %v1598, %v1573
        %v1600 = vrot.slane %v1573, 4
        %v1601 = vsel %vm337, %v1585, %v1600
        %v1603 = vunpack.c.l.s4 1934713408
        %v1604 = vunpack.c.0.s8 %v1603
        %v1605 = vperm.slane %v1599, %v1604
        %v1607 = vunpack.c.l.s4 1934713408
        %v1608 = vunpack.c.0.s8 %v1607
        %v1609 = vperm.slane %v1601, %v1608
        %v1610 = vrot.slane %v1593, 4
        %v1611 = vsel %vm337, 0.0, %v1610
        %v1612 = vrot.slane %v1597, 4
        %v1613 = vsel %vm337, 0.0, %v1612
        %v1614 = vrot.slane %v1605, 4
        %v1615 = vsel %vm337, 0.0, %v1614
        %v1616 = vrot.slane %v1609, 4
        %v1617 = vsel %vm337, 0.0, %v1616
        %v1618 = vrot.slane %v1549, 4
        %v1619 = vsel %vm337, %v1618, %v1541
        %v1620 = vrot.slane %v1541, 4
        %v1621 = vsel %vm337, %v1549, %v1620
        %v1623 = vunpack.c.l.s4 1983009808
        %v1624 = vunpack.c.0.s8 %v1623
        %v1625 = vperm.slane %v1619, %v1624
        %v1627 = vunpack.c.l.s4 1983009808
        %v1628 = vunpack.c.0.s8 %v1627
        %v1629 = vperm.slane %v1621, %v1628
        %v1630 = vrot.slane %v1553, 4
        %v1631 = vsel %vm337, %v1630, %v1545
        %v1632 = vrot.slane %v1545, 4
        %v1633 = vsel %vm337, %v1553, %v1632
        %v1635 = vunpack.c.l.s4 1983009808
        %v1636 = vunpack.c.0.s8 %v1635
        %v1637 = vperm.slane %v1631, %v1636
        %v1639 = vunpack.c.l.s4 1983009808
        %v1640 = vunpack.c.0.s8 %v1639
        %v1641 = vperm.slane %v1633, %v1640
        %v1642 = vrot.slane %v1637, 4
        %v1643 = vsel %vm337, %v1642, %v1625
        %v1644 = vrot.slane %v1625, 4
        %v1645 = vsel %vm337, %v1637, %v1644
        %v1647 = vunpack.c.l.s4 1934713408
        %v1648 = vunpack.c.0.s8 %v1647
        %v1649 = vperm.slane %v1643, %v1648
        %v1651 = vunpack.c.l.s4 1934713408
        %v1652 = vunpack.c.0.s8 %v1651
        %v1653 = vperm.slane %v1645, %v1652
        %v1654 = vrot.slane %v1641, 4
        %v1655 = vsel %vm337, %v1654, %v1629
        %v1656 = vrot.slane %v1629, 4
        %v1657 = vsel %vm337, %v1641, %v1656
        %v1659 = vunpack.c.l.s4 1934713408
        %v1660 = vunpack.c.0.s8 %v1659
        %v1661 = vperm.slane %v1655, %v1660
        %v1663 = vunpack.c.l.s4 1934713408
        %v1664 = vunpack.c.0.s8 %v1663
        %v1665 = vperm.slane %v1657, %v1664
        %v1666 = vrot.slane %v1649, 4
        %v1667 = vsel %vm337, 0.0, %v1666
        %v1668 = vrot.slane %v1653, 4
        %v1669 = vsel %vm337, 0.0, %v1668
        %v1670 = vrot.slane %v1661, 4
        %v1671 = vsel %vm337, 0.0, %v1670
        %v1672 = vrot.slane %v1665, 4
        %v1673 = vsel %vm337, 0.0, %v1672
        %1675 = vrot.lane.b32.xlu0 %v1611, 16
        %v1676 = vpop.permute.xlu0 %1675
        %1679 = vrot.lane.b32.xlu0 %v1597, 32
        %v1680 = vpop.permute.xlu0 %1679
        %1683 = vrot.lane.b32.xlu0 %v1613, 48
        %v1684 = vpop.permute.xlu0 %1683
        %1687 = vrot.lane.b32.xlu0 %v1605, 64
        %v1688 = vpop.permute.xlu0 %1687
        %1691 = vrot.lane.b32.xlu0 %v1615, 80
        %v1692 = vpop.permute.xlu0 %1691
        %1695 = vrot.lane.b32.xlu0 %v1609, 96
        %v1696 = vpop.permute.xlu0 %1695
        %1699 = vrot.lane.b32.xlu0 %v1617, 112
        %v1700 = vpop.permute.xlu0 %1699
        %1703 = vrot.lane.b32.xlu0 %v1667, 16
        %v1704 = vpop.permute.xlu0 %1703
        %1707 = vrot.lane.b32.xlu0 %v1653, 32
        %v1708 = vpop.permute.xlu0 %1707
        %1711 = vrot.lane.b32.xlu0 %v1669, 48
        %v1712 = vpop.permute.xlu0 %1711
        %1715 = vrot.lane.b32.xlu0 %v1661, 64
        %v1716 = vpop.permute.xlu0 %1715
        %1719 = vrot.lane.b32.xlu0 %v1671, 80
        %v1720 = vpop.permute.xlu0 %1719
        %1723 = vrot.lane.b32.xlu0 %v1665, 96
        %v1724 = vpop.permute.xlu0 %1723
        %1727 = vrot.lane.b32.xlu0 %v1673, 112
        %v1728 = vpop.permute.xlu0 %1727
        %v1730 = vsel %vm666, %v1593, %v1676
        %v1731 = vsel %vm668, %v1730, %v1680
        %v1732 = vsel %vm670, %v1731, %v1684
        %v1733 = vsel %vm672, %v1732, %v1688
        %v1734 = vsel %vm674, %v1733, %v1692
        %v1735 = vsel %vm676, %v1734, %v1696
        %v1736 = vsel %vm678, %v1735, %v1700
        %v1737 = vsel %vm666, %v1649, %v1704
        %v1738 = vsel %vm668, %v1737, %v1708
        %v1739 = vsel %vm670, %v1738, %v1712
        %v1740 = vsel %vm672, %v1739, %v1716
        %v1741 = vsel %vm674, %v1740, %v1720
        %v1742 = vsel %vm676, %v1741, %v1724
        %v1743 = vsel %vm678, %v1742, %v1728
        %s1744 = scalar_lea.vmem %s3, 32
        %v1745 = vld [vmem:[%s1744] sm:$0xff]
        %v1747 = vsel %vm904, %v1745, 0
        %v1750 = vsel %vm908, %v1736, 0
        %v1753 = vsel %vm908, %v1743, 0
        %1755 = vmatpush.msra.mxu0 0.0
        %1756 = vmatpush.msra.mxu0 0.0
        %1757 = vmatpush.msra.mxu0 0.0
        %1758 = vmatpush.msra.mxu0 0.0
        %1759 = vmatpush.msra.mxu0 0.0
        %1760 = vmatpush.msra.mxu0 0.0
        %1761 = vmatpush.msra.mxu0 0.0
        %1762 = vmatpush.msra.mxu0 0.0
        %1763 = vmatpush.msra.mxu0 0.0
        %1764 = vmatpush.msra.mxu0 0.0
        %1765 = vmatpush.msra.mxu0 0.0
        %1766 = vmatpush.msra.mxu0 0.0
        %1767 = vmatpush.msra.mxu0 0.0
        %1768 = vmatpush.msra.mxu0 0.0
        %1769 = vmatpush.msra.mxu0 0.0
        %1770 = vmatpush.msra.mxu0 %v1750
        %1771 = vmatmul.f32.gmra.mxu0 %v1747
        %v1772 = vpop.f32.mrf.mxu0
        %v1773 = vadd.f32 0.0, %v1772
        %1774 = vdwg.mxu0
        %1775 = vmatpush.msra.mxu0 0.0
        %1776 = vmatpush.msra.mxu0 0.0
        %1777 = vmatpush.msra.mxu0 0.0
        %1778 = vmatpush.msra.mxu0 0.0
        %1779 = vmatpush.msra.mxu0 0.0
        %1780 = vmatpush.msra.mxu0 0.0
        %1781 = vmatpush.msra.mxu0 0.0
        %1782 = vmatpush.msra.mxu0 0.0
        %1783 = vmatpush.msra.mxu0 0.0
        %1784 = vmatpush.msra.mxu0 0.0
        %1785 = vmatpush.msra.mxu0 0.0
        %1786 = vmatpush.msra.mxu0 0.0
        %1787 = vmatpush.msra.mxu0 0.0
        %1788 = vmatpush.msra.mxu0 0.0
        %1789 = vmatpush.msra.mxu0 0.0
        %1790 = vmatpush.msra.mxu0 %v1753
        %1791 = vmatmul.f32.gmra.mxu0 %v1747
        %v1792 = vpop.f32.mrf.mxu0
        %v1793 = vadd.f32 0.0, %v1792
        %1794 = vdwg.mxu0
        %v1795 = vadd.f32 %v1520, %v1773
        %v1796 = vadd.f32 %v1521, %v1793
        %v1797 = vld [vmem:[#allocation2 + $0x1] sm:$0xff]
        %v1798 = vld [vmem:[#allocation2 + $0x9] sm:$0xff]
        %v1799 = vld [vmem:[#allocation2 + $0x19] sm:$0xff]
        %v1800 = vld [vmem:[#allocation2 + $0x21] sm:$0xff]
        %v1801 = vld [vmem:[#allocation2 + $0x31] sm:$0xff]
        %v1802 = vld [vmem:[#allocation2 + $0x39] sm:$0xff]
        %v1803 = vld [vmem:[#allocation2 + $0x49] sm:$0xff]
        %v1804 = vld [vmem:[#allocation2 + $0x51] sm:$0xff]
        %1813 = vrot.lane.b32.xlu0 %v1797, 126
        %v1814 = vpop.permute.xlu0 %1813
        %1815 = vrot.lane.b32.xlu0 %v1798, 126
        %v1816 = vpop.permute.xlu0 %1815
        %1817 = vrot.lane.b32.xlu0 %v1799, 126
        %v1818 = vpop.permute.xlu0 %1817
        %1819 = vrot.lane.b32.xlu0 %v1800, 126
        %v1820 = vpop.permute.xlu0 %1819
        %1821 = vrot.lane.b32.xlu0 %v1801, 126
        %v1822 = vpop.permute.xlu0 %1821
        %1823 = vrot.lane.b32.xlu0 %v1802, 126
        %v1824 = vpop.permute.xlu0 %1823
        %1825 = vrot.lane.b32.xlu0 %v1803, 126
        %v1826 = vpop.permute.xlu0 %1825
        %1827 = vrot.lane.b32.xlu0 %v1804, 126
        %v1828 = vpop.permute.xlu0 %1827
        %v1837 = vrot.slane %v1822, 4
        %v1838 = vsel %vm337, %v1837, %v1814
        %v1839 = vrot.slane %v1814, 4
        %v1840 = vsel %vm337, %v1822, %v1839
        %v1842 = vunpack.c.l.s4 1983009808
        %v1843 = vunpack.c.0.s8 %v1842
        %v1844 = vperm.slane %v1838, %v1843
        %v1846 = vunpack.c.l.s4 1983009808
        %v1847 = vunpack.c.0.s8 %v1846
        %v1848 = vperm.slane %v1840, %v1847
        %v1849 = vrot.slane %v1826, 4
        %v1850 = vsel %vm337, %v1849, %v1818
        %v1851 = vrot.slane %v1818, 4
        %v1852 = vsel %vm337, %v1826, %v1851
        %v1854 = vunpack.c.l.s4 1983009808
        %v1855 = vunpack.c.0.s8 %v1854
        %v1856 = vperm.slane %v1850, %v1855
        %v1858 = vunpack.c.l.s4 1983009808
        %v1859 = vunpack.c.0.s8 %v1858
        %v1860 = vperm.slane %v1852, %v1859
        %v1861 = vrot.slane %v1856, 4
        %v1862 = vsel %vm337, %v1861, %v1844
        %v1863 = vrot.slane %v1844, 4
        %v1864 = vsel %vm337, %v1856, %v1863
        %v1866 = vunpack.c.l.s4 1934713408
        %v1867 = vunpack.c.0.s8 %v1866
        %v1868 = vperm.slane %v1862, %v1867
        %v1870 = vunpack.c.l.s4 1934713408
        %v1871 = vunpack.c.0.s8 %v1870
        %v1872 = vperm.slane %v1864, %v1871
        %v1873 = vrot.slane %v1860, 4
        %v1874 = vsel %vm337, %v1873, %v1848
        %v1875 = vrot.slane %v1848, 4
        %v1876 = vsel %vm337, %v1860, %v1875
        %v1878 = vunpack.c.l.s4 1934713408
        %v1879 = vunpack.c.0.s8 %v1878
        %v1880 = vperm.slane %v1874, %v1879
        %v1882 = vunpack.c.l.s4 1934713408
        %v1883 = vunpack.c.0.s8 %v1882
        %v1884 = vperm.slane %v1876, %v1883
        %v1885 = vrot.slane %v1868, 4
        %v1886 = vsel %vm337, 0.0, %v1885
        %v1887 = vrot.slane %v1872, 4
        %v1888 = vsel %vm337, 0.0, %v1887
        %v1889 = vrot.slane %v1880, 4
        %v1890 = vsel %vm337, 0.0, %v1889
        %v1891 = vrot.slane %v1884, 4
        %v1892 = vsel %vm337, 0.0, %v1891
        %v1893 = vrot.slane %v1824, 4
        %v1894 = vsel %vm337, %v1893, %v1816
        %v1895 = vrot.slane %v1816, 4
        %v1896 = vsel %vm337, %v1824, %v1895
        %v1898 = vunpack.c.l.s4 1983009808
        %v1899 = vunpack.c.0.s8 %v1898
        %v1900 = vperm.slane %v1894, %v1899
        %v1902 = vunpack.c.l.s4 1983009808
        %v1903 = vunpack.c.0.s8 %v1902
        %v1904 = vperm.slane %v1896, %v1903
        %v1905 = vrot.slane %v1828, 4
        %v1906 = vsel %vm337, %v1905, %v1820
        %v1907 = vrot.slane %v1820, 4
        %v1908 = vsel %vm337, %v1828, %v1907
        %v1910 = vunpack.c.l.s4 1983009808
        %v1911 = vunpack.c.0.s8 %v1910
        %v1912 = vperm.slane %v1906, %v1911
        %v1914 = vunpack.c.l.s4 1983009808
        %v1915 = vunpack.c.0.s8 %v1914
        %v1916 = vperm.slane %v1908, %v1915
        %v1917 = vrot.slane %v1912, 4
        %v1918 = vsel %vm337, %v1917, %v1900
        %v1919 = vrot.slane %v1900, 4
        %v1920 = vsel %vm337, %v1912, %v1919
        %v1922 = vunpack.c.l.s4 1934713408
        %v1923 = vunpack.c.0.s8 %v1922
        %v1924 = vperm.slane %v1918, %v1923
        %v1926 = vunpack.c.l.s4 1934713408
        %v1927 = vunpack.c.0.s8 %v1926
        %v1928 = vperm.slane %v1920, %v1927
        %v1929 = vrot.slane %v1916, 4
        %v1930 = vsel %vm337, %v1929, %v1904
        %v1931 = vrot.slane %v1904, 4
        %v1932 = vsel %vm337, %v1916, %v1931
        %v1934 = vunpack.c.l.s4 1934713408
        %v1935 = vunpack.c.0.s8 %v1934
        %v1936 = vperm.slane %v1930, %v1935
        %v1938 = vunpack.c.l.s4 1934713408
        %v1939 = vunpack.c.0.s8 %v1938
        %v1940 = vperm.slane %v1932, %v1939
        %v1941 = vrot.slane %v1924, 4
        %v1942 = vsel %vm337, 0.0, %v1941
        %v1943 = vrot.slane %v1928, 4
        %v1944 = vsel %vm337, 0.0, %v1943
        %v1945 = vrot.slane %v1936, 4
        %v1946 = vsel %vm337, 0.0, %v1945
        %v1947 = vrot.slane %v1940, 4
        %v1948 = vsel %vm337, 0.0, %v1947
        %1950 = vrot.lane.b32.xlu0 %v1886, 16
        %v1951 = vpop.permute.xlu0 %1950
        %1954 = vrot.lane.b32.xlu0 %v1872, 32
        %v1955 = vpop.permute.xlu0 %1954
        %1958 = vrot.lane.b32.xlu0 %v1888, 48
        %v1959 = vpop.permute.xlu0 %1958
        %1962 = vrot.lane.b32.xlu0 %v1880, 64
        %v1963 = vpop.permute.xlu0 %1962
        %1966 = vrot.lane.b32.xlu0 %v1890, 80
        %v1967 = vpop.permute.xlu0 %1966
        %1970 = vrot.lane.b32.xlu0 %v1884, 96
        %v1971 = vpop.permute.xlu0 %1970
        %1974 = vrot.lane.b32.xlu0 %v1892, 112
        %v1975 = vpop.permute.xlu0 %1974
        %1978 = vrot.lane.b32.xlu0 %v1942, 16
        %v1979 = vpop.permute.xlu0 %1978
        %1982 = vrot.lane.b32.xlu0 %v1928, 32
        %v1983 = vpop.permute.xlu0 %1982
        %1986 = vrot.lane.b32.xlu0 %v1944, 48
        %v1987 = vpop.permute.xlu0 %1986
        %1990 = vrot.lane.b32.xlu0 %v1936, 64
        %v1991 = vpop.permute.xlu0 %1990
        %1994 = vrot.lane.b32.xlu0 %v1946, 80
        %v1995 = vpop.permute.xlu0 %1994
        %1998 = vrot.lane.b32.xlu0 %v1940, 96
        %v1999 = vpop.permute.xlu0 %1998
        %2002 = vrot.lane.b32.xlu0 %v1948, 112
        %v2003 = vpop.permute.xlu0 %2002
        %v2005 = vsel %vm666, %v1868, %v1951
        %v2006 = vsel %vm668, %v2005, %v1955
        %v2007 = vsel %vm670, %v2006, %v1959
        %v2008 = vsel %vm672, %v2007, %v1963
        %v2009 = vsel %vm674, %v2008, %v1967
        %v2010 = vsel %vm676, %v2009, %v1971
        %v2011 = vsel %vm678, %v2010, %v1975
        %v2012 = vsel %vm666, %v1924, %v1979
        %v2013 = vsel %vm668, %v2012, %v1983
        %v2014 = vsel %vm670, %v2013, %v1987
        %v2015 = vsel %vm672, %v2014, %v1991
        %v2016 = vsel %vm674, %v2015, %v1995
        %v2017 = vsel %vm676, %v2016, %v1999
        %v2018 = vsel %vm678, %v2017, %v2003
        %s2019 = scalar_lea.vmem %s3, 40
        %v2020 = vld [vmem:[%s2019] sm:$0xff]
        %v2022 = vsel %vm904, %v2020, 0
        %v2025 = vsel %vm908, %v2011, 0
        %v2028 = vsel %vm908, %v2018, 0
        %2030 = vmatpush.msra.mxu0 0.0
        %2031 = vmatpush.msra.mxu0 0.0
        %2032 = vmatpush.msra.mxu0 0.0
        %2033 = vmatpush.msra.mxu0 0.0
        %2034 = vmatpush.msra.mxu0 0.0
        %2035 = vmatpush.msra.mxu0 0.0
        %2036 = vmatpush.msra.mxu0 0.0
        %2037 = vmatpush.msra.mxu0 0.0
        %2038 = vmatpush.msra.mxu0 0.0
        %2039 = vmatpush.msra.mxu0 0.0
        %2040 = vmatpush.msra.mxu0 0.0
        %2041 = vmatpush.msra.mxu0 0.0
        %2042 = vmatpush.msra.mxu0 0.0
        %2043 = vmatpush.msra.mxu0 0.0
        %2044 = vmatpush.msra.mxu0 0.0
        %2045 = vmatpush.msra.mxu0 %v2025
        %2046 = vmatmul.f32.gmra.mxu0 %v2022
        %v2047 = vpop.f32.mrf.mxu0
        %v2048 = vadd.f32 0.0, %v2047
        %2049 = vdwg.mxu0
        %2050 = vmatpush.msra.mxu0 0.0
        %2051 = vmatpush.msra.mxu0 0.0
        %2052 = vmatpush.msra.mxu0 0.0
        %2053 = vmatpush.msra.mxu0 0.0
        %2054 = vmatpush.msra.mxu0 0.0
        %2055 = vmatpush.msra.mxu0 0.0
        %2056 = vmatpush.msra.mxu0 0.0
        %2057 = vmatpush.msra.mxu0 0.0
        %2058 = vmatpush.msra.mxu0 0.0
        %2059 = vmatpush.msra.mxu0 0.0
        %2060 = vmatpush.msra.mxu0 0.0
        %2061 = vmatpush.msra.mxu0 0.0
        %2062 = vmatpush.msra.mxu0 0.0
        %2063 = vmatpush.msra.mxu0 0.0
        %2064 = vmatpush.msra.mxu0 0.0
        %2065 = vmatpush.msra.mxu0 %v2028
        %2066 = vmatmul.f32.gmra.mxu0 %v2022
        %v2067 = vpop.f32.mrf.mxu0
        %v2068 = vadd.f32 0.0, %v2067
        %2069 = vdwg.mxu0
        %v2070 = vadd.f32 %v1795, %v2048
        %v2071 = vadd.f32 %v1796, %v2068
        %v2072 = vld [vmem:[#allocation2 + $0x2] sm:$0xff]
        %v2073 = vld [vmem:[#allocation2 + $0xa] sm:$0xff]
        %v2074 = vld [vmem:[#allocation2 + $0x1a] sm:$0xff]
        %v2075 = vld [vmem:[#allocation2 + $0x22] sm:$0xff]
        %v2076 = vld [vmem:[#allocation2 + $0x32] sm:$0xff]
        %v2077 = vld [vmem:[#allocation2 + $0x3a] sm:$0xff]
        %v2078 = vld [vmem:[#allocation2 + $0x4a] sm:$0xff]
        %v2079 = vld [vmem:[#allocation2 + $0x52] sm:$0xff]
        %v2080 = vrot.slane %v2076, 4
        %v2081 = vsel %vm337, %v2080, %v2072
        %v2082 = vrot.slane %v2072, 4
        %v2083 = vsel %vm337, %v2076, %v2082
        %v2085 = vunpack.c.l.s4 1983009808
        %v2086 = vunpack.c.0.s8 %v2085
        %v2087 = vperm.slane %v2081, %v2086
        %v2089 = vunpack.c.l.s4 1983009808
        %v2090 = vunpack.c.0.s8 %v2089
        %v2091 = vperm.slane %v2083, %v2090
        %v2092 = vrot.slane %v2078, 4
        %v2093 = vsel %vm337, %v2092, %v2074
        %v2094 = vrot.slane %v2074, 4
        %v2095 = vsel %vm337, %v2078, %v2094
        %v2097 = vunpack.c.l.s4 1983009808
        %v2098 = vunpack.c.0.s8 %v2097
        %v2099 = vperm.slane %v2093, %v2098
        %v2101 = vunpack.c.l.s4 1983009808
        %v2102 = vunpack.c.0.s8 %v2101
        %v2103 = vperm.slane %v2095, %v2102
        %v2104 = vrot.slane %v2099, 4
        %v2105 = vsel %vm337, %v2104, %v2087
        %v2106 = vrot.slane %v2087, 4
        %v2107 = vsel %vm337, %v2099, %v2106
        %v2109 = vunpack.c.l.s4 1934713408
        %v2110 = vunpack.c.0.s8 %v2109
        %v2111 = vperm.slane %v2105, %v2110
        %v2113 = vunpack.c.l.s4 1934713408
        %v2114 = vunpack.c.0.s8 %v2113
        %v2115 = vperm.slane %v2107, %v2114
        %v2116 = vrot.slane %v2103, 4
        %v2117 = vsel %vm337, %v2116, %v2091
        %v2118 = vrot.slane %v2091, 4
        %v2119 = vsel %vm337, %v2103, %v2118
        %v2121 = vunpack.c.l.s4 1934713408
        %v2122 = vunpack.c.0.s8 %v2121
        %v2123 = vperm.slane %v2117, %v2122
        %v2125 = vunpack.c.l.s4 1934713408
        %v2126 = vunpack.c.0.s8 %v2125
        %v2127 = vperm.slane %v2119, %v2126
        %v2128 = vrot.slane %v2111, 4
        %v2129 = vsel %vm337, 0.0, %v2128
        %v2130 = vrot.slane %v2115, 4
        %v2131 = vsel %vm337, 0.0, %v2130
        %v2132 = vrot.slane %v2123, 4
        %v2133 = vsel %vm337, 0.0, %v2132
        %v2134 = vrot.slane %v2127, 4
        %v2135 = vsel %vm337, 0.0, %v2134
        %v2136 = vrot.slane %v2077, 4
        %v2137 = vsel %vm337, %v2136, %v2073
        %v2138 = vrot.slane %v2073, 4
        %v2139 = vsel %vm337, %v2077, %v2138
        %v2141 = vunpack.c.l.s4 1983009808
        %v2142 = vunpack.c.0.s8 %v2141
        %v2143 = vperm.slane %v2137, %v2142
        %v2145 = vunpack.c.l.s4 1983009808
        %v2146 = vunpack.c.0.s8 %v2145
        %v2147 = vperm.slane %v2139, %v2146
        %v2148 = vrot.slane %v2079, 4
        %v2149 = vsel %vm337, %v2148, %v2075
        %v2150 = vrot.slane %v2075, 4
        %v2151 = vsel %vm337, %v2079, %v2150
        %v2153 = vunpack.c.l.s4 1983009808
        %v2154 = vunpack.c.0.s8 %v2153
        %v2155 = vperm.slane %v2149, %v2154
        %v2157 = vunpack.c.l.s4 1983009808
        %v2158 = vunpack.c.0.s8 %v2157
        %v2159 = vperm.slane %v2151, %v2158
        %v2160 = vrot.slane %v2155, 4
        %v2161 = vsel %vm337, %v2160, %v2143
        %v2162 = vrot.slane %v2143, 4
        %v2163 = vsel %vm337, %v2155, %v2162
        %v2165 = vunpack.c.l.s4 1934713408
        %v2166 = vunpack.c.0.s8 %v2165
        %v2167 = vperm.slane %v2161, %v2166
        %v2169 = vunpack.c.l.s4 1934713408
        %v2170 = vunpack.c.0.s8 %v2169
        %v2171 = vperm.slane %v2163, %v2170
        %v2172 = vrot.slane %v2159, 4
        %v2173 = vsel %vm337, %v2172, %v2147
        %v2174 = vrot.slane %v2147, 4
        %v2175 = vsel %vm337, %v2159, %v2174
        %v2177 = vunpack.c.l.s4 1934713408
        %v2178 = vunpack.c.0.s8 %v2177
        %v2179 = vperm.slane %v2173, %v2178
        %v2181 = vunpack.c.l.s4 1934713408
        %v2182 = vunpack.c.0.s8 %v2181
        %v2183 = vperm.slane %v2175, %v2182
        %v2184 = vrot.slane %v2167, 4
        %v2185 = vsel %vm337, 0.0, %v2184
        %v2186 = vrot.slane %v2171, 4
        %v2187 = vsel %vm337, 0.0, %v2186
        %v2188 = vrot.slane %v2179, 4
        %v2189 = vsel %vm337, 0.0, %v2188
        %v2190 = vrot.slane %v2183, 4
        %v2191 = vsel %vm337, 0.0, %v2190
        %2193 = vrot.lane.b32.xlu0 %v2129, 16
        %v2194 = vpop.permute.xlu0 %2193
        %2197 = vrot.lane.b32.xlu0 %v2115, 32
        %v2198 = vpop.permute.xlu0 %2197
        %2201 = vrot.lane.b32.xlu0 %v2131, 48
        %v2202 = vpop.permute.xlu0 %2201
        %2205 = vrot.lane.b32.xlu0 %v2123, 64
        %v2206 = vpop.permute.xlu0 %2205
        %2209 = vrot.lane.b32.xlu0 %v2133, 80
        %v2210 = vpop.permute.xlu0 %2209
        %2213 = vrot.lane.b32.xlu0 %v2127, 96
        %v2214 = vpop.permute.xlu0 %2213
        %2217 = vrot.lane.b32.xlu0 %v2135, 112
        %v2218 = vpop.permute.xlu0 %2217
        %2221 = vrot.lane.b32.xlu0 %v2185, 16
        %v2222 = vpop.permute.xlu0 %2221
        %2225 = vrot.lane.b32.xlu0 %v2171, 32
        %v2226 = vpop.permute.xlu0 %2225
        %2229 = vrot.lane.b32.xlu0 %v2187, 48
        %v2230 = vpop.permute.xlu0 %2229
        %2233 = vrot.lane.b32.xlu0 %v2179, 64
        %v2234 = vpop.permute.xlu0 %2233
        %2237 = vrot.lane.b32.xlu0 %v2189, 80
        %v2238 = vpop.permute.xlu0 %2237
        %2241 = vrot.lane.b32.xlu0 %v2183, 96
        %v2242 = vpop.permute.xlu0 %2241
        %2245 = vrot.lane.b32.xlu0 %v2191, 112
        %v2246 = vpop.permute.xlu0 %2245
        %v2248 = vsel %vm666, %v2111, %v2194
        %v2249 = vsel %vm668, %v2248, %v2198
        %v2250 = vsel %vm670, %v2249, %v2202
        %v2251 = vsel %vm672, %v2250, %v2206
        %v2252 = vsel %vm674, %v2251, %v2210
        %v2253 = vsel %vm676, %v2252, %v2214
        %v2254 = vsel %vm678, %v2253, %v2218
        %v2255 = vsel %vm666, %v2167, %v2222
        %v2256 = vsel %vm668, %v2255, %v2226
        %v2257 = vsel %vm670, %v2256, %v2230
        %v2258 = vsel %vm672, %v2257, %v2234
        %v2259 = vsel %vm674, %v2258, %v2238
        %v2260 = vsel %vm676, %v2259, %v2242
        %v2261 = vsel %vm678, %v2260, %v2246
        %s2262 = scalar_lea.vmem %s3, 48
        %v2263 = vld [vmem:[%s2262] sm:$0xff]
        %v2265 = vsel %vm904, %v2263, 0
        %v2268 = vsel %vm908, %v2254, 0
        %v2271 = vsel %vm908, %v2261, 0
        %2273 = vmatpush.msra.mxu0 0.0
        %2274 = vmatpush.msra.mxu0 0.0
        %2275 = vmatpush.msra.mxu0 0.0
        %2276 = vmatpush.msra.mxu0 0.0
        %2277 = vmatpush.msra.mxu0 0.0
        %2278 = vmatpush.msra.mxu0 0.0
        %2279 = vmatpush.msra.mxu0 0.0
        %2280 = vmatpush.msra.mxu0 0.0
        %2281 = vmatpush.msra.mxu0 0.0
        %2282 = vmatpush.msra.mxu0 0.0
        %2283 = vmatpush.msra.mxu0 0.0
        %2284 = vmatpush.msra.mxu0 0.0
        %2285 = vmatpush.msra.mxu0 0.0
        %2286 = vmatpush.msra.mxu0 0.0
        %2287 = vmatpush.msra.mxu0 0.0
        %2288 = vmatpush.msra.mxu0 %v2268
        %2289 = vmatmul.f32.gmra.mxu0 %v2265
        %v2290 = vpop.f32.mrf.mxu0
        %v2291 = vadd.f32 0.0, %v2290
        %2292 = vdwg.mxu0
        %2293 = vmatpush.msra.mxu0 0.0
        %2294 = vmatpush.msra.mxu0 0.0
        %2295 = vmatpush.msra.mxu0 0.0
        %2296 = vmatpush.msra.mxu0 0.0
        %2297 = vmatpush.msra.mxu0 0.0
        %2298 = vmatpush.msra.mxu0 0.0
        %2299 = vmatpush.msra.mxu0 0.0
        %2300 = vmatpush.msra.mxu0 0.0
        %2301 = vmatpush.msra.mxu0 0.0
        %2302 = vmatpush.msra.mxu0 0.0
        %2303 = vmatpush.msra.mxu0 0.0
        %2304 = vmatpush.msra.mxu0 0.0
        %2305 = vmatpush.msra.mxu0 0.0
        %2306 = vmatpush.msra.mxu0 0.0
        %2307 = vmatpush.msra.mxu0 0.0
        %2308 = vmatpush.msra.mxu0 %v2271
        %2309 = vmatmul.f32.gmra.mxu0 %v2265
        %v2310 = vpop.f32.mrf.mxu0
        %v2311 = vadd.f32 0.0, %v2310
        %2312 = vdwg.mxu0
        %v2313 = vadd.f32 %v2070, %v2291
        %v2314 = vadd.f32 %v2071, %v2311
        %v2315 = vld [vmem:[#allocation2 + $0x2] sm:$0xff]
        %v2316 = vld [vmem:[#allocation2 + $0xa] sm:$0xff]
        %v2317 = vld [vmem:[#allocation2 + $0x1a] sm:$0xff]
        %v2318 = vld [vmem:[#allocation2 + $0x22] sm:$0xff]
        %v2319 = vld [vmem:[#allocation2 + $0x32] sm:$0xff]
        %v2320 = vld [vmem:[#allocation2 + $0x3a] sm:$0xff]
        %v2321 = vld [vmem:[#allocation2 + $0x4a] sm:$0xff]
        %v2322 = vld [vmem:[#allocation2 + $0x52] sm:$0xff]
        %2331 = vrot.lane.b32.xlu0 %v2315, 127
        %v2332 = vpop.permute.xlu0 %2331
        %2333 = vrot.lane.b32.xlu0 %v2316, 127
        %v2334 = vpop.permute.xlu0 %2333
        %2335 = vrot.lane.b32.xlu0 %v2317, 127
        %v2336 = vpop.permute.xlu0 %2335
        %2337 = vrot.lane.b32.xlu0 %v2318, 127
        %v2338 = vpop.permute.xlu0 %2337
        %2339 = vrot.lane.b32.xlu0 %v2319, 127
        %v2340 = vpop.permute.xlu0 %2339
        %2341 = vrot.lane.b32.xlu0 %v2320, 127
        %v2342 = vpop.permute.xlu0 %2341
        %2343 = vrot.lane.b32.xlu0 %v2321, 127
        %v2344 = vpop.permute.xlu0 %2343
        %2345 = vrot.lane.b32.xlu0 %v2322, 127
        %v2346 = vpop.permute.xlu0 %2345
        %v2355 = vrot.slane %v2340, 4
        %v2356 = vsel %vm337, %v2355, %v2332
        %v2357 = vrot.slane %v2332, 4
        %v2358 = vsel %vm337, %v2340, %v2357
        %v2360 = vunpack.c.l.s4 1983009808
        %v2361 = vunpack.c.0.s8 %v2360
        %v2362 = vperm.slane %v2356, %v2361
        %v2364 = vunpack.c.l.s4 1983009808
        %v2365 = vunpack.c.0.s8 %v2364
        %v2366 = vperm.slane %v2358, %v2365
        %v2367 = vrot.slane %v2344, 4
        %v2368 = vsel %vm337, %v2367, %v2336
        %v2369 = vrot.slane %v2336, 4
        %v2370 = vsel %vm337, %v2344, %v2369
        %v2372 = vunpack.c.l.s4 1983009808
        %v2373 = vunpack.c.0.s8 %v2372
        %v2374 = vperm.slane %v2368, %v2373
        %v2376 = vunpack.c.l.s4 1983009808
        %v2377 = vunpack.c.0.s8 %v2376
        %v2378 = vperm.slane %v2370, %v2377
        %v2379 = vrot.slane %v2374, 4
        %v2380 = vsel %vm337, %v2379, %v2362
        %v2381 = vrot.slane %v2362, 4
        %v2382 = vsel %vm337, %v2374, %v2381
        %v2384 = vunpack.c.l.s4 1934713408
        %v2385 = vunpack.c.0.s8 %v2384
        %v2386 = vperm.slane %v2380, %v2385
        %v2388 = vunpack.c.l.s4 1934713408
        %v2389 = vunpack.c.0.s8 %v2388
        %v2390 = vperm.slane %v2382, %v2389
        %v2391 = vrot.slane %v2378, 4
        %v2392 = vsel %vm337, %v2391, %v2366
        %v2393 = vrot.slane %v2366, 4
        %v2394 = vsel %vm337, %v2378, %v2393
        %v2396 = vunpack.c.l.s4 1934713408
        %v2397 = vunpack.c.0.s8 %v2396
        %v2398 = vperm.slane %v2392, %v2397
        %v2400 = vunpack.c.l.s4 1934713408
        %v2401 = vunpack.c.0.s8 %v2400
        %v2402 = vperm.slane %v2394, %v2401
        %v2403 = vrot.slane %v2386, 4
        %v2404 = vsel %vm337, 0.0, %v2403
        %v2405 = vrot.slane %v2390, 4
        %v2406 = vsel %vm337, 0.0, %v2405
        %v2407 = vrot.slane %v2398, 4
        %v2408 = vsel %vm337, 0.0, %v2407
        %v2409 = vrot.slane %v2402, 4
        %v2410 = vsel %vm337, 0.0, %v2409
        %v2411 = vrot.slane %v2342, 4
        %v2412 = vsel %vm337, %v2411, %v2334
        %v2413 = vrot.slane %v2334, 4
        %v2414 = vsel %vm337, %v2342, %v2413
        %v2416 = vunpack.c.l.s4 1983009808
        %v2417 = vunpack.c.0.s8 %v2416
        %v2418 = vperm.slane %v2412, %v2417
        %v2420 = vunpack.c.l.s4 1983009808
        %v2421 = vunpack.c.0.s8 %v2420
        %v2422 = vperm.slane %v2414, %v2421
        %v2423 = vrot.slane %v2346, 4
        %v2424 = vsel %vm337, %v2423, %v2338
        %v2425 = vrot.slane %v2338, 4
        %v2426 = vsel %vm337, %v2346, %v2425
        %v2428 = vunpack.c.l.s4 1983009808
        %v2429 = vunpack.c.0.s8 %v2428
        %v2430 = vperm.slane %v2424, %v2429
        %v2432 = vunpack.c.l.s4 1983009808
        %v2433 = vunpack.c.0.s8 %v2432
        %v2434 = vperm.slane %v2426, %v2433
        %v2435 = vrot.slane %v2430, 4
        %v2436 = vsel %vm337, %v2435, %v2418
        %v2437 = vrot.slane %v2418, 4
        %v2438 = vsel %vm337, %v2430, %v2437
        %v2440 = vunpack.c.l.s4 1934713408
        %v2441 = vunpack.c.0.s8 %v2440
        %v2442 = vperm.slane %v2436, %v2441
        %v2444 = vunpack.c.l.s4 1934713408
        %v2445 = vunpack.c.0.s8 %v2444
        %v2446 = vperm.slane %v2438, %v2445
        %v2447 = vrot.slane %v2434, 4
        %v2448 = vsel %vm337, %v2447, %v2422
        %v2449 = vrot.slane %v2422, 4
        %v2450 = vsel %vm337, %v2434, %v2449
        %v2452 = vunpack.c.l.s4 1934713408
        %v2453 = vunpack.c.0.s8 %v2452
        %v2454 = vperm.slane %v2448, %v2453
        %v2456 = vunpack.c.l.s4 1934713408
        %v2457 = vunpack.c.0.s8 %v2456
        %v2458 = vperm.slane %v2450, %v2457
        %v2459 = vrot.slane %v2442, 4
        %v2460 = vsel %vm337, 0.0, %v2459
        %v2461 = vrot.slane %v2446, 4
        %v2462 = vsel %vm337, 0.0, %v2461
        %v2463 = vrot.slane %v2454, 4
        %v2464 = vsel %vm337, 0.0, %v2463
        %v2465 = vrot.slane %v2458, 4
        %v2466 = vsel %vm337, 0.0, %v2465
        %2468 = vrot.lane.b32.xlu0 %v2404, 16
        %v2469 = vpop.permute.xlu0 %2468
        %2472 = vrot.lane.b32.xlu0 %v2390, 32
        %v2473 = vpop.permute.xlu0 %2472
        %2476 = vrot.lane.b32.xlu0 %v2406, 48
        %v2477 = vpop.permute.xlu0 %2476
        %2480 = vrot.lane.b32.xlu0 %v2398, 64
        %v2481 = vpop.permute.xlu0 %2480
        %2484 = vrot.lane.b32.xlu0 %v2408, 80
        %v2485 = vpop.permute.xlu0 %2484
        %2488 = vrot.lane.b32.xlu0 %v2402, 96
        %v2489 = vpop.permute.xlu0 %2488
        %2492 = vrot.lane.b32.xlu0 %v2410, 112
        %v2493 = vpop.permute.xlu0 %2492
        %2496 = vrot.lane.b32.xlu0 %v2460, 16
        %v2497 = vpop.permute.xlu0 %2496
        %2500 = vrot.lane.b32.xlu0 %v2446, 32
        %v2501 = vpop.permute.xlu0 %2500
        %2504 = vrot.lane.b32.xlu0 %v2462, 48
        %v2505 = vpop.permute.xlu0 %2504
        %2508 = vrot.lane.b32.xlu0 %v2454, 64
        %v2509 = vpop.permute.xlu0 %2508
        %2512 = vrot.lane.b32.xlu0 %v2464, 80
        %v2513 = vpop.permute.xlu0 %2512
        %2516 = vrot.lane.b32.xlu0 %v2458, 96
        %v2517 = vpop.permute.xlu0 %2516
        %2520 = vrot.lane.b32.xlu0 %v2466, 112
        %v2521 = vpop.permute.xlu0 %2520
        %v2523 = vsel %vm666, %v2386, %v2469
        %v2524 = vsel %vm668, %v2523, %v2473
        %v2525 = vsel %vm670, %v2524, %v2477
        %v2526 = vsel %vm672, %v2525, %v2481
        %v2527 = vsel %vm674, %v2526, %v2485
        %v2528 = vsel %vm676, %v2527, %v2489
        %v2529 = vsel %vm678, %v2528, %v2493
        %v2530 = vsel %vm666, %v2442, %v2497
        %v2531 = vsel %vm668, %v2530, %v2501
        %v2532 = vsel %vm670, %v2531, %v2505
        %v2533 = vsel %vm672, %v2532, %v2509
        %v2534 = vsel %vm674, %v2533, %v2513
        %v2535 = vsel %vm676, %v2534, %v2517
        %v2536 = vsel %vm678, %v2535, %v2521
        %s2537 = scalar_lea.vmem %s3, 56
        %v2538 = vld [vmem:[%s2537] sm:$0xff]
        %v2540 = vsel %vm904, %v2538, 0
        %v2543 = vsel %vm908, %v2529, 0
        %v2546 = vsel %vm908, %v2536, 0
        %2548 = vmatpush.msra.mxu0 0.0
        %2549 = vmatpush.msra.mxu0 0.0
        %2550 = vmatpush.msra.mxu0 0.0
        %2551 = vmatpush.msra.mxu0 0.0
        %2552 = vmatpush.msra.mxu0 0.0
        %2553 = vmatpush.msra.mxu0 0.0
        %2554 = vmatpush.msra.mxu0 0.0
        %2555 = vmatpush.msra.mxu0 0.0
        %2556 = vmatpush.msra.mxu0 0.0
        %2557 = vmatpush.msra.mxu0 0.0
        %2558 = vmatpush.msra.mxu0 0.0
        %2559 = vmatpush.msra.mxu0 0.0
        %2560 = vmatpush.msra.mxu0 0.0
        %2561 = vmatpush.msra.mxu0 0.0
        %2562 = vmatpush.msra.mxu0 0.0
        %2563 = vmatpush.msra.mxu0 %v2543
        %2564 = vmatmul.f32.gmra.mxu0 %v2540
        %v2565 = vpop.f32.mrf.mxu0
        %v2566 = vadd.f32 0.0, %v2565
        %2567 = vdwg.mxu0
        %2568 = vmatpush.msra.mxu0 0.0
        %2569 = vmatpush.msra.mxu0 0.0
        %2570 = vmatpush.msra.mxu0 0.0
        %2571 = vmatpush.msra.mxu0 0.0
        %2572 = vmatpush.msra.mxu0 0.0
        %2573 = vmatpush.msra.mxu0 0.0
        %2574 = vmatpush.msra.mxu0 0.0
        %2575 = vmatpush.msra.mxu0 0.0
        %2576 = vmatpush.msra.mxu0 0.0
        %2577 = vmatpush.msra.mxu0 0.0
        %2578 = vmatpush.msra.mxu0 0.0
        %2579 = vmatpush.msra.mxu0 0.0
        %2580 = vmatpush.msra.mxu0 0.0
        %2581 = vmatpush.msra.mxu0 0.0
        %2582 = vmatpush.msra.mxu0 0.0
        %2583 = vmatpush.msra.mxu0 %v2546
        %2584 = vmatmul.f32.gmra.mxu0 %v2540
        %v2585 = vpop.f32.mrf.mxu0
        %v2586 = vadd.f32 0.0, %v2585
        %2587 = vdwg.mxu0
        %v2588 = vadd.f32 %v2313, %v2566
        %v2589 = vadd.f32 %v2314, %v2586
        %v2590 = vld [vmem:[#allocation2 + $0x2] sm:$0xff]
        %v2591 = vld [vmem:[#allocation2 + $0xa] sm:$0xff]
        %v2592 = vld [vmem:[#allocation2 + $0x1a] sm:$0xff]
        %v2593 = vld [vmem:[#allocation2 + $0x22] sm:$0xff]
        %v2594 = vld [vmem:[#allocation2 + $0x32] sm:$0xff]
        %v2595 = vld [vmem:[#allocation2 + $0x3a] sm:$0xff]
        %v2596 = vld [vmem:[#allocation2 + $0x4a] sm:$0xff]
        %v2597 = vld [vmem:[#allocation2 + $0x52] sm:$0xff]
        %2606 = vrot.lane.b32.xlu0 %v2590, 126
        %v2607 = vpop.permute.xlu0 %2606
        %2608 = vrot.lane.b32.xlu0 %v2591, 126
        %v2609 = vpop.permute.xlu0 %2608
        %2610 = vrot.lane.b32.xlu0 %v2592, 126
        %v2611 = vpop.permute.xlu0 %2610
        %2612 = vrot.lane.b32.xlu0 %v2593, 126
        %v2613 = vpop.permute.xlu0 %2612
        %2614 = vrot.lane.b32.xlu0 %v2594, 126
        %v2615 = vpop.permute.xlu0 %2614
        %2616 = vrot.lane.b32.xlu0 %v2595, 126
        %v2617 = vpop.permute.xlu0 %2616
        %2618 = vrot.lane.b32.xlu0 %v2596, 126
        %v2619 = vpop.permute.xlu0 %2618
        %2620 = vrot.lane.b32.xlu0 %v2597, 126
        %v2621 = vpop.permute.xlu0 %2620
        %v2630 = vrot.slane %v2615, 4
        %v2631 = vsel %vm337, %v2630, %v2607
        %v2632 = vrot.slane %v2607, 4
        %v2633 = vsel %vm337, %v2615, %v2632
        %v2635 = vunpack.c.l.s4 1983009808
        %v2636 = vunpack.c.0.s8 %v2635
        %v2637 = vperm.slane %v2631, %v2636
        %v2639 = vunpack.c.l.s4 1983009808
        %v2640 = vunpack.c.0.s8 %v2639
        %v2641 = vperm.slane %v2633, %v2640
        %v2642 = vrot.slane %v2619, 4
        %v2643 = vsel %vm337, %v2642, %v2611
        %v2644 = vrot.slane %v2611, 4
        %v2645 = vsel %vm337, %v2619, %v2644
        %v2647 = vunpack.c.l.s4 1983009808
        %v2648 = vunpack.c.0.s8 %v2647
        %v2649 = vperm.slane %v2643, %v2648
        %v2651 = vunpack.c.l.s4 1983009808
        %v2652 = vunpack.c.0.s8 %v2651
        %v2653 = vperm.slane %v2645, %v2652
        %v2654 = vrot.slane %v2649, 4
        %v2655 = vsel %vm337, %v2654, %v2637
        %v2656 = vrot.slane %v2637, 4
        %v2657 = vsel %vm337, %v2649, %v2656
        %v2659 = vunpack.c.l.s4 1934713408
        %v2660 = vunpack.c.0.s8 %v2659
        %v2661 = vperm.slane %v2655, %v2660
        %v2663 = vunpack.c.l.s4 1934713408
        %v2664 = vunpack.c.0.s8 %v2663
        %v2665 = vperm.slane %v2657, %v2664
        %v2666 = vrot.slane %v2653, 4
        %v2667 = vsel %vm337, %v2666, %v2641
        %v2668 = vrot.slane %v2641, 4
        %v2669 = vsel %vm337, %v2653, %v2668
        %v2671 = vunpack.c.l.s4 1934713408
        %v2672 = vunpack.c.0.s8 %v2671
        %v2673 = vperm.slane %v2667, %v2672
        %v2675 = vunpack.c.l.s4 1934713408
        %v2676 = vunpack.c.0.s8 %v2675
        %v2677 = vperm.slane %v2669, %v2676
        %v2678 = vrot.slane %v2661, 4
        %v2679 = vsel %vm337, 0.0, %v2678
        %v2680 = vrot.slane %v2665, 4
        %v2681 = vsel %vm337, 0.0, %v2680
        %v2682 = vrot.slane %v2673, 4
        %v2683 = vsel %vm337, 0.0, %v2682
        %v2684 = vrot.slane %v2677, 4
        %v2685 = vsel %vm337, 0.0, %v2684
        %v2686 = vrot.slane %v2617, 4
        %v2687 = vsel %vm337, %v2686, %v2609
        %v2688 = vrot.slane %v2609, 4
        %v2689 = vsel %vm337, %v2617, %v2688
        %v2691 = vunpack.c.l.s4 1983009808
        %v2692 = vunpack.c.0.s8 %v2691
        %v2693 = vperm.slane %v2687, %v2692
        %v2695 = vunpack.c.l.s4 1983009808
        %v2696 = vunpack.c.0.s8 %v2695
        %v2697 = vperm.slane %v2689, %v2696
        %v2698 = vrot.slane %v2621, 4
        %v2699 = vsel %vm337, %v2698, %v2613
        %v2700 = vrot.slane %v2613, 4
        %v2701 = vsel %vm337, %v2621, %v2700
        %v2703 = vunpack.c.l.s4 1983009808
        %v2704 = vunpack.c.0.s8 %v2703
        %v2705 = vperm.slane %v2699, %v2704
        %v2707 = vunpack.c.l.s4 1983009808
        %v2708 = vunpack.c.0.s8 %v2707
        %v2709 = vperm.slane %v2701, %v2708
        %v2710 = vrot.slane %v2705, 4
        %v2711 = vsel %vm337, %v2710, %v2693
        %v2712 = vrot.slane %v2693, 4
        %v2713 = vsel %vm337, %v2705, %v2712
        %v2715 = vunpack.c.l.s4 1934713408
        %v2716 = vunpack.c.0.s8 %v2715
        %v2717 = vperm.slane %v2711, %v2716
        %v2719 = vunpack.c.l.s4 1934713408
        %v2720 = vunpack.c.0.s8 %v2719
        %v2721 = vperm.slane %v2713, %v2720
        %v2722 = vrot.slane %v2709, 4
        %v2723 = vsel %vm337, %v2722, %v2697
        %v2724 = vrot.slane %v2697, 4
        %v2725 = vsel %vm337, %v2709, %v2724
        %v2727 = vunpack.c.l.s4 1934713408
        %v2728 = vunpack.c.0.s8 %v2727
        %v2729 = vperm.slane %v2723, %v2728
        %v2731 = vunpack.c.l.s4 1934713408
        %v2732 = vunpack.c.0.s8 %v2731
        %v2733 = vperm.slane %v2725, %v2732
        %v2734 = vrot.slane %v2717, 4
        %v2735 = vsel %vm337, 0.0, %v2734
        %v2736 = vrot.slane %v2721, 4
        %v2737 = vsel %vm337, 0.0, %v2736
        %v2738 = vrot.slane %v2729, 4
        %v2739 = vsel %vm337, 0.0, %v2738
        %v2740 = vrot.slane %v2733, 4
        %v2741 = vsel %vm337, 0.0, %v2740
        %2743 = vrot.lane.b32.xlu0 %v2679, 16
        %v2744 = vpop.permute.xlu0 %2743
        %2747 = vrot.lane.b32.xlu0 %v2665, 32
        %v2748 = vpop.permute.xlu0 %2747
        %2751 = vrot.lane.b32.xlu0 %v2681, 48
        %v2752 = vpop.permute.xlu0 %2751
        %2755 = vrot.lane.b32.xlu0 %v2673, 64
        %v2756 = vpop.permute.xlu0 %2755
        %2759 = vrot.lane.b32.xlu0 %v2683, 80
        %v2760 = vpop.permute.xlu0 %2759
        %2763 = vrot.lane.b32.xlu0 %v2677, 96
        %v2764 = vpop.permute.xlu0 %2763
        %2767 = vrot.lane.b32.xlu0 %v2685, 112
        %v2768 = vpop.permute.xlu0 %2767
        %2771 = vrot.lane.b32.xlu0 %v2735, 16
        %v2772 = vpop.permute.xlu0 %2771
        %2775 = vrot.lane.b32.xlu0 %v2721, 32
        %v2776 = vpop.permute.xlu0 %2775
        %2779 = vrot.lane.b32.xlu0 %v2737, 48
        %v2780 = vpop.permute.xlu0 %2779
        %2783 = vrot.lane.b32.xlu0 %v2729, 64
        %v2784 = vpop.permute.xlu0 %2783
        %2787 = vrot.lane.b32.xlu0 %v2739, 80
        %v2788 = vpop.permute.xlu0 %2787
        %2791 = vrot.lane.b32.xlu0 %v2733, 96
        %v2792 = vpop.permute.xlu0 %2791
        %2795 = vrot.lane.b32.xlu0 %v2741, 112
        %v2796 = vpop.permute.xlu0 %2795
        %v2798 = vsel %vm666, %v2661, %v2744
        %v2799 = vsel %vm668, %v2798, %v2748
        %v2800 = vsel %vm670, %v2799, %v2752
        %v2801 = vsel %vm672, %v2800, %v2756
        %v2802 = vsel %vm674, %v2801, %v2760
        %v2803 = vsel %vm676, %v2802, %v2764
        %v2804 = vsel %vm678, %v2803, %v2768
        %v2805 = vsel %vm666, %v2717, %v2772
        %v2806 = vsel %vm668, %v2805, %v2776
        %v2807 = vsel %vm670, %v2806, %v2780
        %v2808 = vsel %vm672, %v2807, %v2784
        %v2809 = vsel %vm674, %v2808, %v2788
        %v2810 = vsel %vm676, %v2809, %v2792
        %v2811 = vsel %vm678, %v2810, %v2796
        %s2812 = scalar_lea.vmem %s3, 64
        %v2813 = vld [vmem:[%s2812] sm:$0xff]
        %v2815 = vsel %vm904, %v2813, 0
        %v2818 = vsel %vm908, %v2804, 0
        %v2821 = vsel %vm908, %v2811, 0
        %2823 = vmatpush.msra.mxu0 0.0
        %2824 = vmatpush.msra.mxu0 0.0
        %2825 = vmatpush.msra.mxu0 0.0
        %2826 = vmatpush.msra.mxu0 0.0
        %2827 = vmatpush.msra.mxu0 0.0
        %2828 = vmatpush.msra.mxu0 0.0
        %2829 = vmatpush.msra.mxu0 0.0
        %2830 = vmatpush.msra.mxu0 0.0
        %2831 = vmatpush.msra.mxu0 0.0
        %2832 = vmatpush.msra.mxu0 0.0
        %2833 = vmatpush.msra.mxu0 0.0
        %2834 = vmatpush.msra.mxu0 0.0
        %2835 = vmatpush.msra.mxu0 0.0
        %2836 = vmatpush.msra.mxu0 0.0
        %2837 = vmatpush.msra.mxu0 0.0
        %2838 = vmatpush.msra.mxu0 %v2818
        %2839 = vmatmul.f32.gmra.mxu0 %v2815
        %v2840 = vpop.f32.mrf.mxu0
        %v2841 = vadd.f32 0.0, %v2840
        %2842 = vdwg.mxu0
        %2843 = vmatpush.msra.mxu0 0.0
        %2844 = vmatpush.msra.mxu0 0.0
        %2845 = vmatpush.msra.mxu0 0.0
        %2846 = vmatpush.msra.mxu0 0.0
        %2847 = vmatpush.msra.mxu0 0.0
        %2848 = vmatpush.msra.mxu0 0.0
        %2849 = vmatpush.msra.mxu0 0.0
        %2850 = vmatpush.msra.mxu0 0.0
        %2851 = vmatpush.msra.mxu0 0.0
        %2852 = vmatpush.msra.mxu0 0.0
        %2853 = vmatpush.msra.mxu0 0.0
        %2854 = vmatpush.msra.mxu0 0.0
        %2855 = vmatpush.msra.mxu0 0.0
        %2856 = vmatpush.msra.mxu0 0.0
        %2857 = vmatpush.msra.mxu0 0.0
        %2858 = vmatpush.msra.mxu0 %v2821
        %2859 = vmatmul.f32.gmra.mxu0 %v2815
        %v2860 = vpop.f32.mrf.mxu0
        %v2861 = vadd.f32 0.0, %v2860
        %2862 = vdwg.mxu0
        %v2863 = vadd.f32 %v2588, %v2841
        %v2864 = vadd.f32 %v2589, %v2861
        %v2865 = vld [vmem:[%s4] sm:$0xff]
        %2867 = vset.pattern.permute.xlu0 0
        %2868 = vperm.xlu0 %2867, %v2865
        %v2869 = vpop.permute.xlu0 %2868
        %v2871 = vadd.f32 %v2863, %v2869
        %v2872 = vadd.f32 %v2864, %v2869
        %v2873 = vmax.f32 %v2871, 0.0
        %v2874 = vmax.f32 %v2872, 0.0
        %2875 = vst [vmem:[%s217] sm:$0xff] %v2873
        %2876 = vst [vmem:[%s217 + $0x8] sm:$0xff] %v2874
        %s2877 = sand.u32 %s137, 1
        %s2878 = scalar_lea.sflag [#allocation4], %s2877
        %s2879 = sand.u32 %s137, 1
        %s2880 = smul.addr %s2879, 16
        %s2881 = scalar_lea.vmem [#allocation3], %s2880
        // Predicated region
        $region41: #{tpu_custom_call.1} parent=39 // pred_check
          %p2882 = pneg %p147
        $region42: #{tpu_custom_call.1} parent=39 // pred_check_branch
          %2884 = sbr.rel (%p2882) target = $region44
        $region43: #{tpu_custom_call.1} parent=39 // pred_region
          %2886 = vsyncadd %s2878, 0
          %s2887 = smul.addr %s19, 2
          %s2888 = smul.addr %s2887, 8
          %s2889 = scalar_lea.hbm %s5, %s2888
          %s2891 = sshll.u32 %s2881, 4
          %s2892 = int_to_ptr.vmem [resolvable:$true] %s2891
          %s2893 = sshll.u32 %s2889, 4
          %s2894 = int_to_ptr.hbm [resolvable:$true] %s2893
          %2896 = dma.vmem_to_hbm [thread:$0]  %s2892, 256, %s2894, %s2878
        $region44: #{tpu_custom_call.1} parent=39 // pred_fallthru
          _
      $region40: #{tpu_custom_call.1} parent=5 // pred_fallthru
        _
      %p2897 = scmp.le.s32.totalorder 2, %s14
      // Predicated region
      $region45: #{tpu_custom_call.1} parent=5 // pred_check
        %p2898 = pneg %p2897
      $region46: #{tpu_custom_call.1} parent=5 // pred_check_branch
        %2900 = sbr.rel (%p2898) target = $region48
      $region47: #{tpu_custom_call.1} parent=5 // pred_region
        %s2901 = ssub.s32 %s14, 2
        // Predicated region
        $region49: #{tpu_custom_call.1} parent=47 // pred_check
          %p2902 = pneg %p153
        $region50: #{tpu_custom_call.1} parent=47 // pred_check_branch
          %2904 = sbr.rel (%p2902) target = $region52
        $region51: #{tpu_custom_call.1} parent=47 // pred_region
          %s2905 = sand.u32 %s138, 1
          %s2906 = scalar_lea.sflag [#allocation4], %s2905
          %s2907 = sand.u32 %s138, 1
          %s2908 = smul.addr %s2907, 16
          %s2909 = scalar_lea.vmem [#allocation3], %s2908
          %2911 = dma.done %s2906, 256
        $region52: #{tpu_custom_call.1} parent=47 // pred_fallthru
          _
      $region48: #{tpu_custom_call.1} parent=5 // pred_fallthru
        _
    $region6: #{tpu_custom_call.1} parent=1 // loop_footer
      %s18 = sadd.s32 1, %s14
    $region7: #{tpu_custom_call.1} parent=1 // loop_footer_branch
      %13 = sbr.rel target = $region3
    $region8: #{tpu_custom_call.1} parent=1 // loop_exit
      _
    %2912 = vsyncpa [#allocation4], 1
    %s2913 = scalar_lea.sflag [#allocation4], 1
    %2914 = vsyncpa %s2913, 1

</llo_original>
